<compile_context>
chip_gen: v6e
topology: v6e:2x2x1
jax: 0.10.0
libtpu: 0.0.40
codegen_flags: <defaults>
</compile_context>

<pallas_src>
import jax
import jax.numpy as jnp
from jax.experimental import pallas as pl
from jax.experimental.pallas import tpu as pltpu

HIDDEN = 24        # fixed by the module definition
GATE_PAD = 128     # 4*HIDDEN = 96, zero-padded to a full lane tile
OUT_PAD = 128      # linear output (24) zero-padded to a full lane tile


def _round_up(n, m):
    return ((n + m - 1) // m) * m


def _pick_b_blk(batch, cap=32):
    """Sublane-aligned batch block: low padding first, then bigger blocks,
    then >=2 blocks (so v7x megacore gets a shard on each TensorCore)."""
    b8 = _round_up(max(batch, 1), 8)
    best = None
    for blk in range(8, min(cap, b8) + 1, 8):
        b_pad = _round_up(b8, blk)
        pad_frac = (b_pad - b8) / b8
        single = 1 if (b_pad // blk) < 2 and b8 >= 16 else 0
        key = (pad_frac > 0.15, single, -blk)
        if best is None or key < best[0]:
            best = (key, blk, b_pad)
    return best[1], best[2]


def _pick_t_chunk(seq_len, cap=32):
    """Timesteps per grid step: multiple of 8 (sublane tile), minimize padded
    steps, then prefer larger chunks (amortize ~0.35us/grid-step overhead)."""
    t8 = _round_up(max(seq_len, 1), 8)
    best = None
    for tc in range(8, min(cap, t8) + 1, 8):
        t_pad = _round_up(t8, tc)
        key = (t_pad, -tc)
        if best is None or key < best[0]:
            best = (key, tc, t_pad)
    return best[1], best[2]


def _make_kernel(t_total, t_chunk, needs_mask):
    """Kernel for grid (batch_block, t_chunk); t_total / t_chunk are static."""

    def kernel(x_ref, wx_ref, wh_ref, b_ref, wl_ref, bl_ref, out_ref, h_ref, c_ref):
        # x_ref  : (B_blk, T_chunk, P) batch-first input chunk
        # wx_ref : (P, G)   packed input->gate weights [i|f|g|o], lane-padded
        # wh_ref : (H, G)   packed hidden->gate weights
        # b_ref  : (1, G)   b_ih + b_hh, lane-padded
        # wl_ref : (H, 128) linear.weight.T, output lanes zero-padded
        # bl_ref : (1, 128) linear.bias, zero-padded
        # out_ref: (B_blk, 128) lane-dense output block (written on last chunk)
        # h_ref/c_ref: (B_blk, H) VMEM carry across T chunks
        t = pl.program_id(1)
        n_t = pl.num_programs(1)
        H = wl_ref.shape[0]

        @pl.when(t == 0)
        def _():
            h_ref[...] = jnp.zeros_like(h_ref)
            c_ref[...] = jnp.zeros_like(c_ref)

        wx = wx_ref[...]
        wh = wh_ref[...]
        bias = b_ref[...]
        h = h_ref[...]
        c = c_ref[...]

        # Statically unrolled chunk recurrence (t_chunk <= 32, B_blk <= 32):
        # the x-projection dot is off the h critical path, so the scheduler can
        # overlap it with the previous step's gate math.
        for k in range(t_chunk):
            xk = x_ref[:, k, :]                                   # (B_blk, P)
            gates = (jnp.dot(xk, wx, preferred_element_type=jnp.float32)
                     + jnp.dot(h, wh, preferred_element_type=jnp.float32)
                     + bias)                                      # (B_blk, 128)
            sig = jax.nn.sigmoid(gates)                           # EUP slab: i, f, o
            tng = jnp.tanh(gates)                                 # EUP slab: g
            i_g = sig[:, 0 * H:1 * H]
            f_g = sig[:, 1 * H:2 * H]
            g_g = tng[:, 2 * H:3 * H]
            o_g = sig[:, 3 * H:4 * H]
            c_new = f_g * c + i_g * g_g
            h_new = o_g * jnp.tanh(c_new)
            if needs_mask:
                # Padded trailing timesteps (T padded up to a chunk multiple)
                # must not advance the state.
                valid = (t * t_chunk + k) < t_total
                h = jnp.where(valid, h_new, h)
                c = jnp.where(valid, c_new, c)
            else:
                h, c = h_new, c_new

        h_ref[...] = h
        c_ref[...] = c

        @pl.when(t == n_t - 1)
        def _():
            # F.tanh(h_T) @ linear.weight.T + linear.bias, lane-dense (·,128).
            out_ref[...] = (
                jnp.dot(jnp.tanh(h), wl_ref[...], preferred_element_type=jnp.float32)
                + bl_ref[...]
            )

    return kernel


def lstm_model_forward(x, params):
    """x: (B, T, P) float32, batch-first like the PyTorch module."""
    B, T, P = x.shape
    H = HIDDEN
    G = params["wx"].shape[1]
    Gout = params["wl"].shape[1]

    B_blk, B_pad = _pick_b_blk(B)
    T_chunk, T_pad = _pick_t_chunk(T)

    x_f32 = x.astype(jnp.float32)
    if B_pad != B or T_pad != T:
        x_f32 = jnp.pad(x_f32, ((0, B_pad - B), (0, T_pad - T), (0, 0)))

    grid = (B_pad // B_blk, T_pad // T_chunk)
    kernel = _make_kernel(T, T_chunk, needs_mask=(T_pad != T))

    out = pl.pallas_call(
        kernel,
        out_shape=jax.ShapeDtypeStruct((B_pad, Gout), jnp.float32),
        grid=grid,
        in_specs=[
            pl.BlockSpec((B_blk, T_chunk, P), lambda b, t: (b, t, 0)),  # x (batch-first)
            pl.BlockSpec((P, G), lambda b, t: (0, 0)),                  # Wx packed
            pl.BlockSpec((H, G), lambda b, t: (0, 0)),                  # Wh packed
            pl.BlockSpec((1, G), lambda b, t: (0, 0)),                  # bias packed
            pl.BlockSpec((H, Gout), lambda b, t: (0, 0)),               # linear W^T (padded)
            pl.BlockSpec((1, Gout), lambda b, t: (0, 0)),               # linear b (padded)
        ],
        out_specs=pl.BlockSpec((B_blk, Gout), lambda b, t: (b, 0)),
        scratch_shapes=[
            pltpu.VMEM((B_blk, H), jnp.float32),   # h carry across T chunks
            pltpu.VMEM((B_blk, H), jnp.float32),   # c carry across T chunks
        ],
        compiler_params=pltpu.CompilerParams(
            dimension_semantics=("parallel", "arbitrary"),
            vmem_limit_bytes=32 * 1024 * 1024,
        ),
    )(x_f32, params["wx"], params["wh"], params["b"], params["wl"], params["bl"])

    # x.view(len(x), -1, 1): kernel writes a lane-dense (B_pad, 128) slab; slice
    # the real batch rows / 24 output features in the wrapper.
    return out[:B, :H].reshape(B, H, 1)


def init_params(key, p):
    """Deterministic init matching PyTorch shapes (uniform(-1/sqrt(H), 1/sqrt(H)))."""
    H = HIDDEN
    G = GATE_PAD
    k = 1.0 / jnp.sqrt(jnp.float32(H))
    keys = jax.random.split(key, 6)
    # PyTorch layouts: weight_ih_l0 (4H, P), weight_hh_l0 (4H, H), biases (4H,)
    w_ih = jax.random.uniform(keys[0], (4 * H, p), minval=-k, maxval=k, dtype=jnp.float32)
    w_hh = jax.random.uniform(keys[1], (4 * H, H), minval=-k, maxval=k, dtype=jnp.float32)
    b_ih = jax.random.uniform(keys[2], (4 * H,), minval=-k, maxval=k, dtype=jnp.float32)
    b_hh = jax.random.uniform(keys[3], (4 * H,), minval=-k, maxval=k, dtype=jnp.float32)
    w_lin = jax.random.uniform(keys[4], (H, H), minval=-k, maxval=k, dtype=jnp.float32)
    b_lin = jax.random.uniform(keys[5], (H,), minval=-k, maxval=k, dtype=jnp.float32)

    # Packed, lane-padded kernel layouts: gate columns [i|f|g|o], 4H=96 -> 128;
    # linear output 24 -> 128 (zero-padded columns).
    wx = jnp.zeros((p, G), jnp.float32).at[:, :4 * H].set(w_ih.T)
    wh = jnp.zeros((H, G), jnp.float32).at[:, :4 * H].set(w_hh.T)
    b = jnp.zeros((1, G), jnp.float32).at[:, :4 * H].set((b_ih + b_hh)[None, :])
    wl = jnp.zeros((H, OUT_PAD), jnp.float32).at[:, :H].set(w_lin.T)
    bl = jnp.zeros((1, OUT_PAD), jnp.float32).at[:, :H].set(b_lin[None, :])
    return {
        "wx": wx, "wh": wh, "b": b, "wl": wl, "bl": bl,
        # raw PyTorch-layout weights kept for the pure-JAX reference
        "w_ih": w_ih, "w_hh": w_hh, "b_ih": b_ih, "b_hh": b_hh,
        "w_lin": w_lin, "b_lin": b_lin,
    }


def reference_forward(x, params):
    """Pure-JAX reference of the PyTorch forward pass (for correctness check)."""
    B, T, P = x.shape
    H = HIDDEN
    w_ih, w_hh = params["w_ih"], params["w_hh"]
    bias = params["b_ih"] + params["b_hh"]

    def step(carry, x_t):
        h, c = carry
        z = x_t @ w_ih.T + h @ w_hh.T + bias
        i = jax.nn.sigmoid(z[:, 0 * H:1 * H])
        f = jax.nn.sigmoid(z[:, 1 * H:2 * H])
        g = jnp.tanh(z[:, 2 * H:3 * H])
        o = jax.nn.sigmoid(z[:, 3 * H:4 * H])
        c = f * c + i * g
        h = o * jnp.tanh(c)
        return (h, c), None

    init = (jnp.zeros((B, H), jnp.float32), jnp.zeros((B, H), jnp.float32))
    (h_last, _), _ = jax.lax.scan(step, init, jnp.transpose(x, (1, 0, 2)))
    out = jnp.tanh(h_last) @ params["w_lin"].T + params["b_lin"]
    return out.reshape(B, H, 1)


if __name__ == "__main__":
    key = jax.random.PRNGKey(0)
    k1, k2, kp1, kp2 = jax.random.split(key, 4)

    # Case 1: small shapes consistent with the module (batch=2, seq=8, p=4).
    B, T, P = 2, 8, 4
    x = jax.random.normal(k1, (B, T, P), dtype=jnp.float32)
    params = init_params(kp1, P)
    out = jax.block_until_ready(lstm_model_forward(x, params))
    ref = jax.block_until_ready(reference_forward(x, params))
    assert out.shape == (B, HIDDEN, 1), out.shape
    assert jnp.allclose(out, ref, atol=1e-4, rtol=1e-4), float(jnp.max(jnp.abs(out - ref)))

    # Case 2: exercises multiple batch blocks, multiple T chunks, and the
    # padded-timestep masking path (previously untested configurations).
    B, T, P = 12, 42, 5
    x = jax.random.normal(k2, (B, T, P), dtype=jnp.float32)
    params = init_params(kp2, P)
    out = jax.block_until_ready(lstm_model_forward(x, params))
    ref = jax.block_until_ready(reference_forward(x, params))
    assert out.shape == (B, HIDDEN, 1), out.shape
    assert jnp.allclose(out, ref, atol=1e-4, rtol=1e-4), float(jnp.max(jnp.abs(out - ref)))

    print("KERNEL_OK")
</pallas_src>

<mosaic_0001>
module attributes {stable_mosaic.version = 11 : i64} {
  func.func @kernel(%arg0: i32, %arg1: i32, %arg2: memref<8x8x4xf32, #tpu.memory_space<vmem>>, %arg3: memref<4x128xf32, #tpu.memory_space<vmem>>, %arg4: memref<24x128xf32, #tpu.memory_space<vmem>>, %arg5: memref<1x128xf32, #tpu.memory_space<vmem>>, %arg6: memref<24x128xf32, #tpu.memory_space<vmem>>, %arg7: memref<1x128xf32, #tpu.memory_space<vmem>>, %arg8: memref<8x128xf32, #tpu.memory_space<vmem>>, %arg9: memref<8x24xf32, #tpu.memory_space<vmem>>, %arg10: memref<8x24xf32, #tpu.memory_space<vmem>>) attributes {dimension_semantics = [#tpu.dimension_semantics<parallel>, #tpu.dimension_semantics<arbitrary>], iteration_bounds = array<i64: 1, 1>, scalar_prefetch = 0 : i64, scratch_operands = 2 : i64, tpu.core_type = #tpu.core_type<tc>, window_params = [{transform_indices = @transform_0, window_bounds = array<i64: 8, 8, 4>}, {pipeline_mode = #tpu.pipeline_mode<synchronous>, transform_indices = @transform_1, window_bounds = array<i64: 4, 128>}, {pipeline_mode = #tpu.pipeline_mode<synchronous>, transform_indices = @transform_2, window_bounds = array<i64: 24, 128>}, {pipeline_mode = #tpu.pipeline_mode<synchronous>, transform_indices = @transform_3, window_bounds = array<i64: 1, 128>}, {pipeline_mode = #tpu.pipeline_mode<synchronous>, transform_indices = @transform_4, window_bounds = array<i64: 24, 128>}, {pipeline_mode = #tpu.pipeline_mode<synchronous>, transform_indices = @transform_5, window_bounds = array<i64: 1, 128>}, {transform_indices = @transform_6, window_bounds = array<i64: 8, 128>}]} {
    %c0_i32 = arith.constant 0 : i32
    %0 = arith.cmpi eq, %arg1, %c0_i32 : i32
    %1 = arith.extui %0 : i1 to i32
    %c0_i32_0 = arith.constant 0 : i32
    %2 = arith.cmpi ne, %1, %c0_i32_0 : i32
    scf.if %2 {
      %cst_56 = arith.constant 0.000000e+00 : f32
      %189 = vector.broadcast %cst_56 : f32 to vector<8x24xf32>
      %c0_57 = arith.constant 0 : index
      %c0_58 = arith.constant 0 : index
      %190 = vector.load %arg9[%c0_57, %c0_58] : memref<8x24xf32, #tpu.memory_space<vmem>>, vector<8x24xf32>
      tpu.vector_store %arg9[%c0_57, %c0_58], %189 {strides = array<i32>} : memref<8x24xf32, #tpu.memory_space<vmem>>, vector<8x24xf32>,
      %cst_59 = arith.constant 0.000000e+00 : f32
      %191 = vector.broadcast %cst_59 : f32 to vector<8x24xf32>
      %c0_60 = arith.constant 0 : index
      %c0_61 = arith.constant 0 : index
      %192 = vector.load %arg10[%c0_60, %c0_61] : memref<8x24xf32, #tpu.memory_space<vmem>>, vector<8x24xf32>
      tpu.vector_store %arg10[%c0_60, %c0_61], %191 {strides = array<i32>} : memref<8x24xf32, #tpu.memory_space<vmem>>, vector<8x24xf32>,
    } else {
    }
    %c0 = arith.constant 0 : index
    %c0_1 = arith.constant 0 : index
    %3 = vector.load %arg3[%c0, %c0_1] : memref<4x128xf32, #tpu.memory_space<vmem>>, vector<4x128xf32>
    %c0_2 = arith.constant 0 : index
    %c0_3 = arith.constant 0 : index
    %4 = vector.load %arg4[%c0_2, %c0_3] : memref<24x128xf32, #tpu.memory_space<vmem>>, vector<24x128xf32>
    %c0_4 = arith.constant 0 : index
    %c0_5 = arith.constant 0 : index
    %5 = vector.load %arg5[%c0_4, %c0_5] : memref<1x128xf32, #tpu.memory_space<vmem>>, vector<1x128xf32>
    %c0_6 = arith.constant 0 : index
    %c0_7 = arith.constant 0 : index
    %6 = vector.load %arg9[%c0_6, %c0_7] : memref<8x24xf32, #tpu.memory_space<vmem>>, vector<8x24xf32>
    %c0_8 = arith.constant 0 : index
    %c0_9 = arith.constant 0 : index
    %7 = vector.load %arg10[%c0_8, %c0_9] : memref<8x24xf32, #tpu.memory_space<vmem>>, vector<8x24xf32>
    %c0_10 = arith.constant 0 : index
    %c0_11 = arith.constant 0 : index
    %c0_12 = arith.constant 0 : index
    %8 = vector.load %arg2[%c0_10, %c0_11, %c0_12] : memref<8x8x4xf32, #tpu.memory_space<vmem>>, vector<8x1x4xf32>
    %9 = vector.shape_cast %8 : vector<8x1x4xf32> to vector<8x4xf32>
    %cst = arith.constant dense<0.000000e+00> : vector<8x128xf32>
    %10 = tpu.matmul %9, %3, %cst {dimension_numbers = #tpu.dot_dimension_numbers<[1], [0], [0], [1], [0, 0, 1, 1], [], []>} : vector<8x4xf32>, vector<4x128xf32>, vector<8x128xf32> -> vector<8x128xf32>
    %cst_13 = arith.constant dense<0.000000e+00> : vector<8x128xf32>
    %11 = tpu.matmul %6, %4, %cst_13 {dimension_numbers = #tpu.dot_dimension_numbers<[1], [0], [0], [1], [0, 0, 1, 1], [], []>} : vector<8x24xf32>, vector<24x128xf32>, vector<8x128xf32> -> vector<8x128xf32>
    %12 = arith.addf %10, %11 : vector<8x128xf32>
    %13 = vector.broadcast %5 : vector<1x128xf32> to vector<8x128xf32>
    %14 = arith.addf %12, %13 : vector<8x128xf32>
    %15 = arith.negf %14 : vector<8x128xf32>
    %16 = math.exp %15 : vector<8x128xf32>
    %cst_14 = arith.constant 1.000000e+00 : f32
    %17 = vector.broadcast %cst_14 : f32 to vector<8x128xf32>
    %18 = arith.addf %17, %16 : vector<8x128xf32>
    %19 = arith.divf %17, %18 : vector<8x128xf32>
    %20 = math.tanh %14 : vector<8x128xf32>
    %21 = vector.extract_strided_slice %19 {offsets = [0, 0], sizes = [8, 24], strides = [1, 1]} : vector<8x128xf32> to vector<8x24xf32>
    %22 = vector.extract_strided_slice %19 {offsets = [0, 24], sizes = [8, 24], strides = [1, 1]} : vector<8x128xf32> to vector<8x24xf32>
    %23 = vector.extract_strided_slice %20 {offsets = [0, 48], sizes = [8, 24], strides = [1, 1]} : vector<8x128xf32> to vector<8x24xf32>
    %24 = vector.extract_strided_slice %19 {offsets = [0, 72], sizes = [8, 24], strides = [1, 1]} : vector<8x128xf32> to vector<8x24xf32>
    %25 = arith.mulf %22, %7 : vector<8x24xf32>
    %26 = arith.mulf %21, %23 : vector<8x24xf32>
    %27 = arith.addf %25, %26 : vector<8x24xf32>
    %28 = math.tanh %27 : vector<8x24xf32>
    %29 = arith.mulf %24, %28 : vector<8x24xf32>
    %c0_15 = arith.constant 0 : index
    %c1 = arith.constant 1 : index
    %c0_16 = arith.constant 0 : index
    %30 = vector.load %arg2[%c0_15, %c1, %c0_16] : memref<8x8x4xf32, #tpu.memory_space<vmem>>, vector<8x1x4xf32>
    %31 = vector.shape_cast %30 : vector<8x1x4xf32> to vector<8x4xf32>
    %cst_17 = arith.constant dense<0.000000e+00> : vector<8x128xf32>
    %32 = tpu.matmul %31, %3, %cst_17 {dimension_numbers = #tpu.dot_dimension_numbers<[1], [0], [0], [1], [0, 0, 1, 1], [], []>} : vector<8x4xf32>, vector<4x128xf32>, vector<8x128xf32> -> vector<8x128xf32>
    %cst_18 = arith.constant dense<0.000000e+00> : vector<8x128xf32>
    %33 = tpu.matmul %29, %4, %cst_18 {dimension_numbers = #tpu.dot_dimension_numbers<[1], [0], [0], [1], [0, 0, 1, 1], [], []>} : vector<8x24xf32>, vector<24x128xf32>, vector<8x128xf32> -> vector<8x128xf32>
    %34 = arith.addf %32, %33 : vector<8x128xf32>
    %35 = vector.broadcast %5 : vector<1x128xf32> to vector<8x128xf32>
    %36 = arith.addf %34, %35 : vector<8x128xf32>
    %37 = arith.negf %36 : vector<8x128xf32>
    %38 = math.exp %37 : vector<8x128xf32>
    %cst_19 = arith.constant 1.000000e+00 : f32
    %39 = vector.broadcast %cst_19 : f32 to vector<8x128xf32>
    %40 = arith.addf %39, %38 : vector<8x128xf32>
    %41 = arith.divf %39, %40 : vector<8x128xf32>
    %42 = math.tanh %36 : vector<8x128xf32>
    %43 = vector.extract_strided_slice %41 {offsets = [0, 0], sizes = [8, 24], strides = [1, 1]} : vector<8x128xf32> to vector<8x24xf32>
    %44 = vector.extract_strided_slice %41 {offsets = [0, 24], sizes = [8, 24], strides = [1, 1]} : vector<8x128xf32> to vector<8x24xf32>
    %45 = vector.extract_strided_slice %42 {offsets = [0, 48], sizes = [8, 24], strides = [1, 1]} : vector<8x128xf32> to vector<8x24xf32>
    %46 = vector.extract_strided_slice %41 {offsets = [0, 72], sizes = [8, 24], strides = [1, 1]} : vector<8x128xf32> to vector<8x24xf32>
    %47 = arith.mulf %44, %27 : vector<8x24xf32>
    %48 = arith.mulf %43, %45 : vector<8x24xf32>
    %49 = arith.addf %47, %48 : vector<8x24xf32>
    %50 = math.tanh %49 : vector<8x24xf32>
    %51 = arith.mulf %46, %50 : vector<8x24xf32>
    %c0_20 = arith.constant 0 : index
    %c2 = arith.constant 2 : index
    %c0_21 = arith.constant 0 : index
    %52 = vector.load %arg2[%c0_20, %c2, %c0_21] : memref<8x8x4xf32, #tpu.memory_space<vmem>>, vector<8x1x4xf32>
    %53 = vector.shape_cast %52 : vector<8x1x4xf32> to vector<8x4xf32>
    %cst_22 = arith.constant dense<0.000000e+00> : vector<8x128xf32>
    %54 = tpu.matmul %53, %3, %cst_22 {dimension_numbers = #tpu.dot_dimension_numbers<[1], [0], [0], [1], [0, 0, 1, 1], [], []>} : vector<8x4xf32>, vector<4x128xf32>, vector<8x128xf32> -> vector<8x128xf32>
    %cst_23 = arith.constant dense<0.000000e+00> : vector<8x128xf32>
    %55 = tpu.matmul %51, %4, %cst_23 {dimension_numbers = #tpu.dot_dimension_numbers<[1], [0], [0], [1], [0, 0, 1, 1], [], []>} : vector<8x24xf32>, vector<24x128xf32>, vector<8x128xf32> -> vector<8x128xf32>
    %56 = arith.addf %54, %55 : vector<8x128xf32>
    %57 = vector.broadcast %5 : vector<1x128xf32> to vector<8x128xf32>
    %58 = arith.addf %56, %57 : vector<8x128xf32>
    %59 = arith.negf %58 : vector<8x128xf32>
    %60 = math.exp %59 : vector<8x128xf32>
    %cst_24 = arith.constant 1.000000e+00 : f32
    %61 = vector.broadcast %cst_24 : f32 to vector<8x128xf32>
    %62 = arith.addf %61, %60 : vector<8x128xf32>
    %63 = arith.divf %61, %62 : vector<8x128xf32>
    %64 = math.tanh %58 : vector<8x128xf32>
    %65 = vector.extract_strided_slice %63 {offsets = [0, 0], sizes = [8, 24], strides = [1, 1]} : vector<8x128xf32> to vector<8x24xf32>
    %66 = vector.extract_strided_slice %63 {offsets = [0, 24], sizes = [8, 24], strides = [1, 1]} : vector<8x128xf32> to vector<8x24xf32>
    %67 = vector.extract_strided_slice %64 {offsets = [0, 48], sizes = [8, 24], strides = [1, 1]} : vector<8x128xf32> to vector<8x24xf32>
    %68 = vector.extract_strided_slice %63 {offsets = [0, 72], sizes = [8, 24], strides = [1, 1]} : vector<8x128xf32> to vector<8x24xf32>
    %69 = arith.mulf %66, %49 : vector<8x24xf32>
    %70 = arith.mulf %65, %67 : vector<8x24xf32>
    %71 = arith.addf %69, %70 : vector<8x24xf32>
    %72 = math.tanh %71 : vector<8x24xf32>
    %73 = arith.mulf %68, %72 : vector<8x24xf32>
    %c0_25 = arith.constant 0 : index
    %c3 = arith.constant 3 : index
    %c0_26 = arith.constant 0 : index
    %74 = vector.load %arg2[%c0_25, %c3, %c0_26] : memref<8x8x4xf32, #tpu.memory_space<vmem>>, vector<8x1x4xf32>
    %75 = vector.shape_cast %74 : vector<8x1x4xf32> to vector<8x4xf32>
    %cst_27 = arith.constant dense<0.000000e+00> : vector<8x128xf32>
    %76 = tpu.matmul %75, %3, %cst_27 {dimension_numbers = #tpu.dot_dimension_numbers<[1], [0], [0], [1], [0, 0, 1, 1], [], []>} : vector<8x4xf32>, vector<4x128xf32>, vector<8x128xf32> -> vector<8x128xf32>
    %cst_28 = arith.constant dense<0.000000e+00> : vector<8x128xf32>
    %77 = tpu.matmul %73, %4, %cst_28 {dimension_numbers = #tpu.dot_dimension_numbers<[1], [0], [0], [1], [0, 0, 1, 1], [], []>} : vector<8x24xf32>, vector<24x128xf32>, vector<8x128xf32> -> vector<8x128xf32>
    %78 = arith.addf %76, %77 : vector<8x128xf32>
    %79 = vector.broadcast %5 : vector<1x128xf32> to vector<8x128xf32>
    %80 = arith.addf %78, %79 : vector<8x128xf32>
    %81 = arith.negf %80 : vector<8x128xf32>
    %82 = math.exp %81 : vector<8x128xf32>
    %cst_29 = arith.constant 1.000000e+00 : f32
    %83 = vector.broadcast %cst_29 : f32 to vector<8x128xf32>
    %84 = arith.addf %83, %82 : vector<8x128xf32>
    %85 = arith.divf %83, %84 : vector<8x128xf32>
    %86 = math.tanh %80 : vector<8x128xf32>
    %87 = vector.extract_strided_slice %85 {offsets = [0, 0], sizes = [8, 24], strides = [1, 1]} : vector<8x128xf32> to vector<8x24xf32>
    %88 = vector.extract_strided_slice %85 {offsets = [0, 24], sizes = [8, 24], strides = [1, 1]} : vector<8x128xf32> to vector<8x24xf32>
    %89 = vector.extract_strided_slice %86 {offsets = [0, 48], sizes = [8, 24], strides = [1, 1]} : vector<8x128xf32> to vector<8x24xf32>
    %90 = vector.extract_strided_slice %85 {offsets = [0, 72], sizes = [8, 24], strides = [1, 1]} : vector<8x128xf32> to vector<8x24xf32>
    %91 = arith.mulf %88, %71 : vector<8x24xf32>
    %92 = arith.mulf %87, %89 : vector<8x24xf32>
    %93 = arith.addf %91, %92 : vector<8x24xf32>
    %94 = math.tanh %93 : vector<8x24xf32>
    %95 = arith.mulf %90, %94 : vector<8x24xf32>
    %c0_30 = arith.constant 0 : index
    %c4 = arith.constant 4 : index
    %c0_31 = arith.constant 0 : index
    %96 = vector.load %arg2[%c0_30, %c4, %c0_31] : memref<8x8x4xf32, #tpu.memory_space<vmem>>, vector<8x1x4xf32>
    %97 = vector.shape_cast %96 : vector<8x1x4xf32> to vector<8x4xf32>
    %cst_32 = arith.constant dense<0.000000e+00> : vector<8x128xf32>
    %98 = tpu.matmul %97, %3, %cst_32 {dimension_numbers = #tpu.dot_dimension_numbers<[1], [0], [0], [1], [0, 0, 1, 1], [], []>} : vector<8x4xf32>, vector<4x128xf32>, vector<8x128xf32> -> vector<8x128xf32>
    %cst_33 = arith.constant dense<0.000000e+00> : vector<8x128xf32>
    %99 = tpu.matmul %95, %4, %cst_33 {dimension_numbers = #tpu.dot_dimension_numbers<[1], [0], [0], [1], [0, 0, 1, 1], [], []>} : vector<8x24xf32>, vector<24x128xf32>, vector<8x128xf32> -> vector<8x128xf32>
    %100 = arith.addf %98, %99 : vector<8x128xf32>
    %101 = vector.broadcast %5 : vector<1x128xf32> to vector<8x128xf32>
    %102 = arith.addf %100, %101 : vector<8x128xf32>
    %103 = arith.negf %102 : vector<8x128xf32>
    %104 = math.exp %103 : vector<8x128xf32>
    %cst_34 = arith.constant 1.000000e+00 : f32
    %105 = vector.broadcast %cst_34 : f32 to vector<8x128xf32>
    %106 = arith.addf %105, %104 : vector<8x128xf32>
    %107 = arith.divf %105, %106 : vector<8x128xf32>
    %108 = math.tanh %102 : vector<8x128xf32>
    %109 = vector.extract_strided_slice %107 {offsets = [0, 0], sizes = [8, 24], strides = [1, 1]} : vector<8x128xf32> to vector<8x24xf32>
    %110 = vector.extract_strided_slice %107 {offsets = [0, 24], sizes = [8, 24], strides = [1, 1]} : vector<8x128xf32> to vector<8x24xf32>
    %111 = vector.extract_strided_slice %108 {offsets = [0, 48], sizes = [8, 24], strides = [1, 1]} : vector<8x128xf32> to vector<8x24xf32>
    %112 = vector.extract_strided_slice %107 {offsets = [0, 72], sizes = [8, 24], strides = [1, 1]} : vector<8x128xf32> to vector<8x24xf32>
    %113 = arith.mulf %110, %93 : vector<8x24xf32>
    %114 = arith.mulf %109, %111 : vector<8x24xf32>
    %115 = arith.addf %113, %114 : vector<8x24xf32>
    %116 = math.tanh %115 : vector<8x24xf32>
    %117 = arith.mulf %112, %116 : vector<8x24xf32>
    %c0_35 = arith.constant 0 : index
    %c5 = arith.constant 5 : index
    %c0_36 = arith.constant 0 : index
    %118 = vector.load %arg2[%c0_35, %c5, %c0_36] : memref<8x8x4xf32, #tpu.memory_space<vmem>>, vector<8x1x4xf32>
    %119 = vector.shape_cast %118 : vector<8x1x4xf32> to vector<8x4xf32>
    %cst_37 = arith.constant dense<0.000000e+00> : vector<8x128xf32>
    %120 = tpu.matmul %119, %3, %cst_37 {dimension_numbers = #tpu.dot_dimension_numbers<[1], [0], [0], [1], [0, 0, 1, 1], [], []>} : vector<8x4xf32>, vector<4x128xf32>, vector<8x128xf32> -> vector<8x128xf32>
    %cst_38 = arith.constant dense<0.000000e+00> : vector<8x128xf32>
    %121 = tpu.matmul %117, %4, %cst_38 {dimension_numbers = #tpu.dot_dimension_numbers<[1], [0], [0], [1], [0, 0, 1, 1], [], []>} : vector<8x24xf32>, vector<24x128xf32>, vector<8x128xf32> -> vector<8x128xf32>
    %122 = arith.addf %120, %121 : vector<8x128xf32>
    %123 = vector.broadcast %5 : vector<1x128xf32> to vector<8x128xf32>
    %124 = arith.addf %122, %123 : vector<8x128xf32>
    %125 = arith.negf %124 : vector<8x128xf32>
    %126 = math.exp %125 : vector<8x128xf32>
    %cst_39 = arith.constant 1.000000e+00 : f32
    %127 = vector.broadcast %cst_39 : f32 to vector<8x128xf32>
    %128 = arith.addf %127, %126 : vector<8x128xf32>
    %129 = arith.divf %127, %128 : vector<8x128xf32>
    %130 = math.tanh %124 : vector<8x128xf32>
    %131 = vector.extract_strided_slice %129 {offsets = [0, 0], sizes = [8, 24], strides = [1, 1]} : vector<8x128xf32> to vector<8x24xf32>
    %132 = vector.extract_strided_slice %129 {offsets = [0, 24], sizes = [8, 24], strides = [1, 1]} : vector<8x128xf32> to vector<8x24xf32>
    %133 = vector.extract_strided_slice %130 {offsets = [0, 48], sizes = [8, 24], strides = [1, 1]} : vector<8x128xf32> to vector<8x24xf32>
    %134 = vector.extract_strided_slice %129 {offsets = [0, 72], sizes = [8, 24], strides = [1, 1]} : vector<8x128xf32> to vector<8x24xf32>
    %135 = arith.mulf %132, %115 : vector<8x24xf32>
    %136 = arith.mulf %131, %133 : vector<8x24xf32>
    %137 = arith.addf %135, %136 : vector<8x24xf32>
    %138 = math.tanh %137 : vector<8x24xf32>
    %139 = arith.mulf %134, %138 : vector<8x24xf32>
    %c0_40 = arith.constant 0 : index
    %c6 = arith.constant 6 : index
    %c0_41 = arith.constant 0 : index
    %140 = vector.load %arg2[%c0_40, %c6, %c0_41] : memref<8x8x4xf32, #tpu.memory_space<vmem>>, vector<8x1x4xf32>
    %141 = vector.shape_cast %140 : vector<8x1x4xf32> to vector<8x4xf32>
    %cst_42 = arith.constant dense<0.000000e+00> : vector<8x128xf32>
    %142 = tpu.matmul %141, %3, %cst_42 {dimension_numbers = #tpu.dot_dimension_numbers<[1], [0], [0], [1], [0, 0, 1, 1], [], []>} : vector<8x4xf32>, vector<4x128xf32>, vector<8x128xf32> -> vector<8x128xf32>
    %cst_43 = arith.constant dense<0.000000e+00> : vector<8x128xf32>
    %143 = tpu.matmul %139, %4, %cst_43 {dimension_numbers = #tpu.dot_dimension_numbers<[1], [0], [0], [1], [0, 0, 1, 1], [], []>} : vector<8x24xf32>, vector<24x128xf32>, vector<8x128xf32> -> vector<8x128xf32>
    %144 = arith.addf %142, %143 : vector<8x128xf32>
    %145 = vector.broadcast %5 : vector<1x128xf32> to vector<8x128xf32>
    %146 = arith.addf %144, %145 : vector<8x128xf32>
    %147 = arith.negf %146 : vector<8x128xf32>
    %148 = math.exp %147 : vector<8x128xf32>
    %cst_44 = arith.constant 1.000000e+00 : f32
    %149 = vector.broadcast %cst_44 : f32 to vector<8x128xf32>
    %150 = arith.addf %149, %148 : vector<8x128xf32>
    %151 = arith.divf %149, %150 : vector<8x128xf32>
    %152 = math.tanh %146 : vector<8x128xf32>
    %153 = vector.extract_strided_slice %151 {offsets = [0, 0], sizes = [8, 24], strides = [1, 1]} : vector<8x128xf32> to vector<8x24xf32>
    %154 = vector.extract_strided_slice %151 {offsets = [0, 24], sizes = [8, 24], strides = [1, 1]} : vector<8x128xf32> to vector<8x24xf32>
    %155 = vector.extract_strided_slice %152 {offsets = [0, 48], sizes = [8, 24], strides = [1, 1]} : vector<8x128xf32> to vector<8x24xf32>
    %156 = vector.extract_strided_slice %151 {offsets = [0, 72], sizes = [8, 24], strides = [1, 1]} : vector<8x128xf32> to vector<8x24xf32>
    %157 = arith.mulf %154, %137 : vector<8x24xf32>
    %158 = arith.mulf %153, %155 : vector<8x24xf32>
    %159 = arith.addf %157, %158 : vector<8x24xf32>
    %160 = math.tanh %159 : vector<8x24xf32>
    %161 = arith.mulf %156, %160 : vector<8x24xf32>
    %c0_45 = arith.constant 0 : index
    %c7 = arith.constant 7 : index
    %c0_46 = arith.constant 0 : index
    %162 = vector.load %arg2[%c0_45, %c7, %c0_46] : memref<8x8x4xf32, #tpu.memory_space<vmem>>, vector<8x1x4xf32>
    %163 = vector.shape_cast %162 : vector<8x1x4xf32> to vector<8x4xf32>
    %cst_47 = arith.constant dense<0.000000e+00> : vector<8x128xf32>
    %164 = tpu.matmul %163, %3, %cst_47 {dimension_numbers = #tpu.dot_dimension_numbers<[1], [0], [0], [1], [0, 0, 1, 1], [], []>} : vector<8x4xf32>, vector<4x128xf32>, vector<8x128xf32> -> vector<8x128xf32>
    %cst_48 = arith.constant dense<0.000000e+00> : vector<8x128xf32>
    %165 = tpu.matmul %161, %4, %cst_48 {dimension_numbers = #tpu.dot_dimension_numbers<[1], [0], [0], [1], [0, 0, 1, 1], [], []>} : vector<8x24xf32>, vector<24x128xf32>, vector<8x128xf32> -> vector<8x128xf32>
    %166 = arith.addf %164, %165 : vector<8x128xf32>
    %167 = vector.broadcast %5 : vector<1x128xf32> to vector<8x128xf32>
    %168 = arith.addf %166, %167 : vector<8x128xf32>
    %169 = arith.negf %168 : vector<8x128xf32>
    %170 = math.exp %169 : vector<8x128xf32>
    %cst_49 = arith.constant 1.000000e+00 : f32
    %171 = vector.broadcast %cst_49 : f32 to vector<8x128xf32>
    %172 = arith.addf %171, %170 : vector<8x128xf32>
    %173 = arith.divf %171, %172 : vector<8x128xf32>
    %174 = math.tanh %168 : vector<8x128xf32>
    %175 = vector.extract_strided_slice %173 {offsets = [0, 0], sizes = [8, 24], strides = [1, 1]} : vector<8x128xf32> to vector<8x24xf32>
    %176 = vector.extract_strided_slice %173 {offsets = [0, 24], sizes = [8, 24], strides = [1, 1]} : vector<8x128xf32> to vector<8x24xf32>
    %177 = vector.extract_strided_slice %174 {offsets = [0, 48], sizes = [8, 24], strides = [1, 1]} : vector<8x128xf32> to vector<8x24xf32>
    %178 = vector.extract_strided_slice %173 {offsets = [0, 72], sizes = [8, 24], strides = [1, 1]} : vector<8x128xf32> to vector<8x24xf32>
    %179 = arith.mulf %176, %159 : vector<8x24xf32>
    %180 = arith.mulf %175, %177 : vector<8x24xf32>
    %181 = arith.addf %179, %180 : vector<8x24xf32>
    %182 = math.tanh %181 : vector<8x24xf32>
    %183 = arith.mulf %178, %182 : vector<8x24xf32>
    %c0_50 = arith.constant 0 : index
    %c0_51 = arith.constant 0 : index
    %184 = vector.load %arg9[%c0_50, %c0_51] : memref<8x24xf32, #tpu.memory_space<vmem>>, vector<8x24xf32>
    tpu.vector_store %arg9[%c0_50, %c0_51], %183 {strides = array<i32>} : memref<8x24xf32, #tpu.memory_space<vmem>>, vector<8x24xf32>,
    %c0_52 = arith.constant 0 : index
    %c0_53 = arith.constant 0 : index
    %185 = vector.load %arg10[%c0_52, %c0_53] : memref<8x24xf32, #tpu.memory_space<vmem>>, vector<8x24xf32>
    tpu.vector_store %arg10[%c0_52, %c0_53], %181 {strides = array<i32>} : memref<8x24xf32, #tpu.memory_space<vmem>>, vector<8x24xf32>,
    %c0_i32_54 = arith.constant 0 : i32
    %186 = arith.cmpi eq, %arg1, %c0_i32_54 : i32
    %187 = arith.extui %186 : i1 to i32
    %c0_i32_55 = arith.constant 0 : i32
    %188 = arith.cmpi ne, %187, %c0_i32_55 : i32
    scf.if %188 {
      %189 = math.tanh %183 : vector<8x24xf32>
      %c0_56 = arith.constant 0 : index
      %c0_57 = arith.constant 0 : index
      %190 = vector.load %arg6[%c0_56, %c0_57] : memref<24x128xf32, #tpu.memory_space<vmem>>, vector<24x128xf32>
      %cst_58 = arith.constant dense<0.000000e+00> : vector<8x128xf32>
      %191 = tpu.matmul %189, %190, %cst_58 {dimension_numbers = #tpu.dot_dimension_numbers<[1], [0], [0], [1], [0, 0, 1, 1], [], []>} : vector<8x24xf32>, vector<24x128xf32>, vector<8x128xf32> -> vector<8x128xf32>
      %c0_59 = arith.constant 0 : index
      %c0_60 = arith.constant 0 : index
      %192 = vector.load %arg7[%c0_59, %c0_60] : memref<1x128xf32, #tpu.memory_space<vmem>>, vector<1x128xf32>
      %193 = vector.broadcast %192 : vector<1x128xf32> to vector<8x128xf32>
      %194 = arith.addf %191, %193 : vector<8x128xf32>
      %c0_61 = arith.constant 0 : index
      %c0_62 = arith.constant 0 : index
      %195 = vector.load %arg8[%c0_61, %c0_62] : memref<8x128xf32, #tpu.memory_space<vmem>>, vector<8x128xf32>
      tpu.vector_store %arg8[%c0_61, %c0_62], %194 {strides = array<i32>} : memref<8x128xf32, #tpu.memory_space<vmem>>, vector<8x128xf32>,
    } else {
    }
    return
  }
  func.func @transform_0(%arg0: i32, %arg1: i32) -> (i32, i32, i32) {
    %c0_i32 = arith.constant 0 : i32
    %c0_i32_0 = arith.constant 0 : i32
    return %arg0, %arg1, %c0_i32 : i32, i32, i32
  }
  func.func @transform_1(%arg0: i32, %arg1: i32) -> (i32, i32) {
    %c0_i32 = arith.constant 0 : i32
    %c0_i32_0 = arith.constant 0 : i32
    %c0_i32_1 = arith.constant 0 : i32
    return %c0_i32, %c0_i32_0 : i32, i32
  }
  func.func @transform_2(%arg0: i32, %arg1: i32) -> (i32, i32) {
    %c0_i32 = arith.constant 0 : i32
    %c0_i32_0 = arith.constant 0 : i32
    %c0_i32_1 = arith.constant 0 : i32
    return %c0_i32, %c0_i32_0 : i32, i32
  }
  func.func @transform_3(%arg0: i32, %arg1: i32) -> (i32, i32) {
    %c0_i32 = arith.constant 0 : i32
    %c0_i32_0 = arith.constant 0 : i32
    %c0_i32_1 = arith.constant 0 : i32
    return %c0_i32, %c0_i32_0 : i32, i32
  }
  func.func @transform_4(%arg0: i32, %arg1: i32) -> (i32, i32) {
    %c0_i32 = arith.constant 0 : i32
    %c0_i32_0 = arith.constant 0 : i32
    %c0_i32_1 = arith.constant 0 : i32
    return %c0_i32, %c0_i32_0 : i32, i32
  }
  func.func @transform_5(%arg0: i32, %arg1: i32) -> (i32, i32) {
    %c0_i32 = arith.constant 0 : i32
    %c0_i32_0 = arith.constant 0 : i32
    %c0_i32_1 = arith.constant 0 : i32
    return %c0_i32, %c0_i32_0 : i32, i32
  }
  func.func @transform_6(%arg0: i32, %arg1: i32) -> (i32, i32) {
    %c0_i32 = arith.constant 0 : i32
    %c0_i32_0 = arith.constant 0 : i32
    return %arg0, %c0_i32 : i32, i32
  }
}

</mosaic_0001>

<llo_original>
// kernel: tpu_custom_call.1
$region0: #{tpu_custom_call.1}
  #allocation0 [shape = 'u32[]', space=smem, size = 0x4, offset = 0x4, fixed_abs, tag = 'smem constant byte address 0x4 - core index']
  #allocation1 [shape = 'u32[144,128]{1,0:T(1,128)}', space=vmem, size = 0x12000, scoped, tag = 'internal scratch']
  #allocation2 [shape = 'f32[8,24]{1,0:T(8,128)}', space=vmem, size = 0x1000, scoped, tag = 'scratch operand']
  #allocation3 [shape = 'f32[8,24]{1,0:T(8,128)}', space=vmem, size = 0x1000, scoped, tag = 'scratch operand']
  %s0 = inlined_call_operand.vmem [shape: f32[8,8,4], index: 0, kind: input, shape index: {}]
  %s1 = inlined_call_operand.vmem [shape: f32[4,128], index: 1, kind: input, shape index: {}]
  %s2 = inlined_call_operand.vmem [shape: f32[24,128], index: 2, kind: input, shape index: {}]
  %s3 = inlined_call_operand.vmem [shape: f32[1,128], index: 3, kind: input, shape index: {}]
  %s4 = inlined_call_operand.vmem [shape: f32[24,128], index: 4, kind: input, shape index: {}]
  %s5 = inlined_call_operand.vmem [shape: f32[1,128], index: 5, kind: input, shape index: {}]
  %s6 = inlined_call_operand.hbm [shape: f32[8,128], index: 6, kind: output, shape index: {}]
  %s7 = sld [smem:[#allocation0]]
  $region42: #{tpu_custom_call.1} parent=0
    _
  %s9 = ssub.s32 1, %s7
  %s10 = scalar_select 0, %s9, %s7
  $region1: #{tpu_custom_call.1} parent=0
    #allocation4 [shape = 'u8[4096]{0}', space=vmem, size = 0x1000, scoped, tag = 'output window, operand 0, single buffered']
    #allocation5 [shape = 's32[1]{0}', space=sflag, size = 0x4, scoped, tag = 'scoped memory for tpu_custom_call.1']
    %11 = vsyncpa [#allocation5], 0
    // Predicated region
    $region2: #{tpu_custom_call.1} parent=1 // pred_check
      _
    $region3: #{tpu_custom_call.1} parent=1 // pred_check_branch
      %13 = sbr.rel (0) target = $region5
    $region4: #{tpu_custom_call.1} parent=1 // pred_region
      _
    $region5: #{tpu_custom_call.1} parent=1 // pred_fallthru
      _
    // Predicated region
    $region6: #{tpu_custom_call.1} parent=1 // pred_check
      _
    $region7: #{tpu_custom_call.1} parent=1 // pred_check_branch
      %15 = sbr.rel (0) target = $region9
    $region8: #{tpu_custom_call.1} parent=1 // pred_region
      _
    $region9: #{tpu_custom_call.1} parent=1 // pred_fallthru
      _
    // Predicated region
    $region10: #{tpu_custom_call.1} parent=1 // pred_check
      _
    $region11: #{tpu_custom_call.1} parent=1 // pred_check_branch
      %17 = sbr.rel (0) target = $region13
    $region12: #{tpu_custom_call.1} parent=1 // pred_region
      _
    $region13: #{tpu_custom_call.1} parent=1 // pred_fallthru
      _
    // Predicated region
    $region14: #{tpu_custom_call.1} parent=1 // pred_check
      _
    $region15: #{tpu_custom_call.1} parent=1 // pred_check_branch
      %19 = sbr.rel (0) target = $region17
    $region16: #{tpu_custom_call.1} parent=1 // pred_region
      _
    $region17: #{tpu_custom_call.1} parent=1 // pred_fallthru
      _
    // Predicated region
    $region18: #{tpu_custom_call.1} parent=1 // pred_check
      _
    $region19: #{tpu_custom_call.1} parent=1 // pred_check_branch
      %21 = sbr.rel (0) target = $region21
    $region20: #{tpu_custom_call.1} parent=1 // pred_region
      _
    $region21: #{tpu_custom_call.1} parent=1 // pred_fallthru
      _
    // Predicated region
    $region22: #{tpu_custom_call.1} parent=1 // pred_check
      _
    $region23: #{tpu_custom_call.1} parent=1 // pred_check_branch
      %23 = sbr.rel (0) target = $region25
    $region24: #{tpu_custom_call.1} parent=1 // pred_region
      _
    $region25: #{tpu_custom_call.1} parent=1 // pred_fallthru
      _
    %p24 = scmp.eq.s32.totalorder 0, 0
    // Predicated region
    $region26: #{tpu_custom_call.1} parent=1 // pred_check
      %p25 = pneg %p24
    $region27: #{tpu_custom_call.1} parent=1 // pred_check_branch
      %27 = sbr.rel (%p25) target = $region29
    $region28: #{tpu_custom_call.1} parent=1 // pred_region
      %vm28 = vcmask 195584
      %29 = vst.msk [vmem:[#allocation2] sm:$0xff] %vm28, 0.0
      %30 = vst.msk [vmem:[#allocation3] sm:$0xff] %vm28, 0.0
    $region29: #{tpu_custom_call.1} parent=1 // pred_fallthru
      _
    %v31 = vld [vmem:[%s1] sm:$0xf]
    %v32 = vld [vmem:[%s2] sm:$0xff]
    %v33 = vld [vmem:[%s2 + $0x8] sm:$0xff]
    %v34 = vld [vmem:[%s2 + $0x10] sm:$0xff]
    %v35 = vld [vmem:[%s3] sm:$0x1]
    %v36 = vld [vmem:[#allocation2] sm:$0xff]
    %v37 = vld [vmem:[#allocation3] sm:$0xff]
    %v38 = vld [vmem:[%s0] sm:$0x1]
    %v39 = vld [vmem:[%s0 + $0x8] sm:$0x1]
    %v40 = vld [vmem:[%s0 + $0x10] sm:$0x1]
    %v41 = vld [vmem:[%s0 + $0x18] sm:$0x1]
    %v42 = vld [vmem:[%s0 + $0x20] sm:$0x1]
    %v43 = vld [vmem:[%s0 + $0x28] sm:$0x1]
    %v44 = vld [vmem:[%s0 + $0x30] sm:$0x1]
    %v45 = vld [vmem:[%s0 + $0x38] sm:$0x1]
    %vm46 = vcmask 195584
    %v48 = vsel %vm46, %v36, 0
    %50 = vmatprep.subr.mxu0 0.0
    %51 = vmatpush1.msra.mxu0 0.0
    %52 = vmatprep.subr.mxu0 0.0
    %53 = vmatpush1.msra.mxu0 0.0
    %54 = vmatprep.subr.mxu0 0.0
    %55 = vmatpush1.msra.mxu0 0.0
    %56 = vmatprep.subr.mxu0 0.0
    %57 = vmatpush1.msra.mxu0 0.0
    %58 = vmatprep.subr.mxu0 0.0
    %59 = vmatpush1.msra.mxu0 0.0
    %60 = vmatprep.subr.mxu0 0.0
    %61 = vmatpush1.msra.mxu0 0.0
    %62 = vmatprep.subr.mxu0 0.0
    %63 = vmatpush1.msra.mxu0 0.0
    %64 = vmatprep.subr.mxu0 0.0
    %65 = vmatpush1.msra.mxu0 0.0
    %66 = vmatprep.subr.mxu0 0.0
    %67 = vmatpush1.msra.mxu0 0.0
    %68 = vmatprep.subr.mxu0 0.0
    %69 = vmatpush1.msra.mxu0 0.0
    %70 = vmatprep.subr.mxu0 0.0
    %71 = vmatpush1.msra.mxu0 0.0
    %72 = vmatprep.subr.mxu0 0.0
    %73 = vmatpush1.msra.mxu0 0.0
    %74 = vmatprep.subr.mxu0 0.0
    %75 = vmatpush1.msra.mxu0 0.0
    %76 = vmatprep.subr.mxu0 0.0
    %77 = vmatpush1.msra.mxu0 %v34
    %78 = vmatprep.subr.mxu0 0.0
    %79 = vmatpush1.msra.mxu0 %v33
    %80 = vmatprep.subr.mxu0 0.0
    %81 = vmatpush1.msra.mxu0 %v32
    %82 = vmatprep.subr.mxu0 0.0
    %83 = vmatpush2.msra.mxu0 0.0
    %84 = vmatprep.subr.mxu0 0.0
    %85 = vmatpush2.msra.mxu0 0.0
    %86 = vmatprep.subr.mxu0 0.0
    %87 = vmatpush2.msra.mxu0 0.0
    %88 = vmatprep.subr.mxu0 0.0
    %89 = vmatpush2.msra.mxu0 0.0
    %90 = vmatprep.subr.mxu0 0.0
    %91 = vmatpush2.msra.mxu0 0.0
    %92 = vmatprep.subr.mxu0 0.0
    %93 = vmatpush2.msra.mxu0 0.0
    %94 = vmatprep.subr.mxu0 0.0
    %95 = vmatpush2.msra.mxu0 0.0
    %96 = vmatprep.subr.mxu0 0.0
    %97 = vmatpush2.msra.mxu0 0.0
    %98 = vmatprep.subr.mxu0 0.0
    %99 = vmatpush2.msra.mxu0 0.0
    %100 = vmatprep.subr.mxu0 0.0
    %101 = vmatpush2.msra.mxu0 0.0
    %102 = vmatprep.subr.mxu0 0.0
    %103 = vmatpush2.msra.mxu0 0.0
    %104 = vmatprep.subr.mxu0 0.0
    %105 = vmatpush2.msra.mxu0 0.0
    %106 = vmatprep.subr.mxu0 0.0
    %107 = vmatpush2.msra.mxu0 0.0
    %108 = vmatprep.subr.mxu0 0.0
    %109 = vmatpush2.msra.mxu0 0.0
    %110 = vmatprep.subr.mxu0 0.0
    %111 = vmatpush2.msra.mxu0 0.0
    %112 = vmatprep.subr.mxu0 0.0
    %113 = vmatpush2.msra.mxu0 0.0
    %114 = vmatprep.mubr.f32.mxu0 0.0
    %115 = vmatmul.mubr.f32.gmra.mxu0 %v48
    %v116 = vpop.f32.mrf.mxu0
    %v117 = vadd.f32 0.0, %v116
    %v118 = vpop.f32.mrf.mxu0
    %119 = vdwg.mxu0
    %v128 = vrot.slane %v39, 7
    %vm129 = vcmask 1041409
    %v130 = vsel %vm129, %v128, %v38
    %v131 = vrot.slane %v40, 6
    %vm132 = vcmask 1042434
    %v133 = vsel %vm132, %v131, %v130
    %v134 = vrot.slane %v41, 5
    %vm135 = vcmask 1043459
    %v136 = vsel %vm135, %v134, %v133
    %v137 = vrot.slane %v42, 4
    %vm138 = vcmask 1044484
    %v139 = vsel %vm138, %v137, %v136
    %v140 = vrot.slane %v43, 3
    %vm141 = vcmask 1045509
    %v142 = vsel %vm141, %v140, %v139
    %v143 = vrot.slane %v44, 2
    %vm144 = vcmask 1046534
    %v145 = vsel %vm144, %v143, %v142
    %v146 = vrot.slane %v45, 1
    %vm147 = vcmask 1047559
    %v148 = vsel %vm147, %v146, %v145
    %vm149 = vcmask 31744
    %v150 = vsel %vm149, %v148, 0
    %vm152 = vcmask 1043456
    %v154 = vsel %vm152, %v31, 0
    %156 = vmatprep.subr.mxu0 0.0
    %157 = vmatpush1.msra.mxu0 0.0
    %158 = vmatprep.subr.mxu0 0.0
    %159 = vmatpush1.msra.mxu0 0.0
    %160 = vmatprep.subr.mxu0 0.0
    %161 = vmatpush1.msra.mxu0 0.0
    %162 = vmatprep.subr.mxu0 0.0
    %163 = vmatpush1.msra.mxu0 0.0
    %164 = vmatprep.subr.mxu0 0.0
    %165 = vmatpush1.msra.mxu0 0.0
    %166 = vmatprep.subr.mxu0 0.0
    %167 = vmatpush1.msra.mxu0 0.0
    %168 = vmatprep.subr.mxu0 0.0
    %169 = vmatpush1.msra.mxu0 0.0
    %170 = vmatprep.subr.mxu0 0.0
    %171 = vmatpush1.msra.mxu0 0.0
    %172 = vmatprep.subr.mxu0 0.0
    %173 = vmatpush1.msra.mxu0 0.0
    %174 = vmatprep.subr.mxu0 0.0
    %175 = vmatpush1.msra.mxu0 0.0
    %176 = vmatprep.subr.mxu0 0.0
    %177 = vmatpush1.msra.mxu0 0.0
    %178 = vmatprep.subr.mxu0 0.0
    %179 = vmatpush1.msra.mxu0 0.0
    %180 = vmatprep.subr.mxu0 0.0
    %181 = vmatpush1.msra.mxu0 0.0
    %182 = vmatprep.subr.mxu0 0.0
    %183 = vmatpush1.msra.mxu0 0.0
    %184 = vmatprep.subr.mxu0 0.0
    %185 = vmatpush1.msra.mxu0 0.0
    %186 = vmatprep.subr.mxu0 0.0
    %187 = vmatpush1.msra.mxu0 %v154
    %188 = vmatprep.subr.mxu0 0.0
    %189 = vmatpush2.msra.mxu0 0.0
    %190 = vmatprep.subr.mxu0 0.0
    %191 = vmatpush2.msra.mxu0 0.0
    %192 = vmatprep.subr.mxu0 0.0
    %193 = vmatpush2.msra.mxu0 0.0
    %194 = vmatprep.subr.mxu0 0.0
    %195 = vmatpush2.msra.mxu0 0.0
    %196 = vmatprep.subr.mxu0 0.0
    %197 = vmatpush2.msra.mxu0 0.0
    %198 = vmatprep.subr.mxu0 0.0
    %199 = vmatpush2.msra.mxu0 0.0
    %200 = vmatprep.subr.mxu0 0.0
    %201 = vmatpush2.msra.mxu0 0.0
    %202 = vmatprep.subr.mxu0 0.0
    %203 = vmatpush2.msra.mxu0 0.0
    %204 = vmatprep.subr.mxu0 0.0
    %205 = vmatpush2.msra.mxu0 0.0
    %206 = vmatprep.subr.mxu0 0.0
    %207 = vmatpush2.msra.mxu0 0.0
    %208 = vmatprep.subr.mxu0 0.0
    %209 = vmatpush2.msra.mxu0 0.0
    %210 = vmatprep.subr.mxu0 0.0
    %211 = vmatpush2.msra.mxu0 0.0
    %212 = vmatprep.subr.mxu0 0.0
    %213 = vmatpush2.msra.mxu0 0.0
    %214 = vmatprep.subr.mxu0 0.0
    %215 = vmatpush2.msra.mxu0 0.0
    %216 = vmatprep.subr.mxu0 0.0
    %217 = vmatpush2.msra.mxu0 0.0
    %218 = vmatprep.subr.mxu0 0.0
    %219 = vmatpush2.msra.mxu0 0.0
    %220 = vmatprep.mubr.f32.mxu0 0.0
    %221 = vmatmul.mubr.f32.gmra.mxu0 %v150
    %v222 = vpop.f32.mrf.mxu0
    %v223 = vadd.f32 %v117, %v222
    %v224 = vpop.f32.mrf.mxu0
    %225 = vdwg.mxu0
    %v227 = vlaneseq
    %v228 = vshrl.u32 %v227, 7
    %v229 = vsub.s32 0, %v228
    %v230 = vrot.slane %v35, %v229
    %v232 = vadd.f32 %v223, %v230
    %v233 = vxor.u32 %v232, 2147483648
    %v234 = vmul.f32 %v233, 1.442695
    %v235 = vpow.pop %v234
    %v236 = vadd.f32 %v235, 1.0
    %v237 = vrcp.pop %v236
    %v238 = vmul.f32 1.0, %v237
    %v239 = vtanh.pop %v232
    %241 = vrot.lane.b32.xlu0 %v37, 24
    %v242 = vpop.permute.xlu0 %241
    %v244 = vmul.f32 %v238, %v242
    %246 = vrot.lane.b32.xlu0 %v239, 80
    %v247 = vpop.permute.xlu0 %246
    %v249 = vmul.f32 %v238, %v247
    %251 = vrot.lane.b32.xlu0 %v249, 24
    %v252 = vpop.permute.xlu0 %251
    %v254 = vadd.f32 %v244, %v252
    %v255 = vtanh.pop %v254
    %257 = vrot.lane.b32.xlu0 %v255, 48
    %v258 = vpop.permute.xlu0 %257
    %v260 = vmul.f32 %v238, %v258
    %v261 = vld [vmem:[%s0 + $0x1] sm:$0x1]
    %v262 = vld [vmem:[%s0 + $0x9] sm:$0x1]
    %v263 = vld [vmem:[%s0 + $0x11] sm:$0x1]
    %v264 = vld [vmem:[%s0 + $0x19] sm:$0x1]
    %v265 = vld [vmem:[%s0 + $0x21] sm:$0x1]
    %v266 = vld [vmem:[%s0 + $0x29] sm:$0x1]
    %v267 = vld [vmem:[%s0 + $0x31] sm:$0x1]
    %v268 = vld [vmem:[%s0 + $0x39] sm:$0x1]
    %270 = vrot.lane.b32.xlu0 %v260, 56
    %v271 = vpop.permute.xlu0 %270
    %v272 = vsel %vm46, %v271, 0
    %274 = vmatprep.subr.mxu0 0.0
    %275 = vmatpush1.msra.mxu0 0.0
    %276 = vmatprep.subr.mxu0 0.0
    %277 = vmatpush1.msra.mxu0 0.0
    %278 = vmatprep.subr.mxu0 0.0
    %279 = vmatpush1.msra.mxu0 0.0
    %280 = vmatprep.subr.mxu0 0.0
    %281 = vmatpush1.msra.mxu0 0.0
    %282 = vmatprep.subr.mxu0 0.0
    %283 = vmatpush1.msra.mxu0 0.0
    %284 = vmatprep.subr.mxu0 0.0
    %285 = vmatpush1.msra.mxu0 0.0
    %286 = vmatprep.subr.mxu0 0.0
    %287 = vmatpush1.msra.mxu0 0.0
    %288 = vmatprep.subr.mxu0 0.0
    %289 = vmatpush1.msra.mxu0 0.0
    %290 = vmatprep.subr.mxu0 0.0
    %291 = vmatpush1.msra.mxu0 0.0
    %292 = vmatprep.subr.mxu0 0.0
    %293 = vmatpush1.msra.mxu0 0.0
    %294 = vmatprep.subr.mxu0 0.0
    %295 = vmatpush1.msra.mxu0 0.0
    %296 = vmatprep.subr.mxu0 0.0
    %297 = vmatpush1.msra.mxu0 0.0
    %298 = vmatprep.subr.mxu0 0.0
    %299 = vmatpush1.msra.mxu0 0.0
    %300 = vmatprep.subr.mxu0 0.0
    %301 = vmatpush1.msra.mxu0 %v34
    %302 = vmatprep.subr.mxu0 0.0
    %303 = vmatpush1.msra.mxu0 %v33
    %304 = vmatprep.subr.mxu0 0.0
    %305 = vmatpush1.msra.mxu0 %v32
    %306 = vmatprep.subr.mxu0 0.0
    %307 = vmatpush2.msra.mxu0 0.0
    %308 = vmatprep.subr.mxu0 0.0
    %309 = vmatpush2.msra.mxu0 0.0
    %310 = vmatprep.subr.mxu0 0.0
    %311 = vmatpush2.msra.mxu0 0.0
    %312 = vmatprep.subr.mxu0 0.0
    %313 = vmatpush2.msra.mxu0 0.0
    %314 = vmatprep.subr.mxu0 0.0
    %315 = vmatpush2.msra.mxu0 0.0
    %316 = vmatprep.subr.mxu0 0.0
    %317 = vmatpush2.msra.mxu0 0.0
    %318 = vmatprep.subr.mxu0 0.0
    %319 = vmatpush2.msra.mxu0 0.0
    %320 = vmatprep.subr.mxu0 0.0
    %321 = vmatpush2.msra.mxu0 0.0
    %322 = vmatprep.subr.mxu0 0.0
    %323 = vmatpush2.msra.mxu0 0.0
    %324 = vmatprep.subr.mxu0 0.0
    %325 = vmatpush2.msra.mxu0 0.0
    %326 = vmatprep.subr.mxu0 0.0
    %327 = vmatpush2.msra.mxu0 0.0
    %328 = vmatprep.subr.mxu0 0.0
    %329 = vmatpush2.msra.mxu0 0.0
    %330 = vmatprep.subr.mxu0 0.0
    %331 = vmatpush2.msra.mxu0 0.0
    %332 = vmatprep.subr.mxu0 0.0
    %333 = vmatpush2.msra.mxu0 0.0
    %334 = vmatprep.subr.mxu0 0.0
    %335 = vmatpush2.msra.mxu0 0.0
    %336 = vmatprep.subr.mxu0 0.0
    %337 = vmatpush2.msra.mxu0 0.0
    %338 = vmatprep.mubr.f32.mxu0 0.0
    %339 = vmatmul.mubr.f32.gmra.mxu0 %v272
    %v340 = vpop.f32.mrf.mxu0
    %v341 = vadd.f32 0.0, %v340
    %v342 = vpop.f32.mrf.mxu0
    %343 = vdwg.mxu0
    %v352 = vrot.slane %v262, 7
    %v353 = vsel %vm129, %v352, %v261
    %v354 = vrot.slane %v263, 6
    %v355 = vsel %vm132, %v354, %v353
    %v356 = vrot.slane %v264, 5
    %v357 = vsel %vm135, %v356, %v355
    %v358 = vrot.slane %v265, 4
    %v359 = vsel %vm138, %v358, %v357
    %v360 = vrot.slane %v266, 3
    %v361 = vsel %vm141, %v360, %v359
    %v362 = vrot.slane %v267, 2
    %v363 = vsel %vm144, %v362, %v361
    %v364 = vrot.slane %v268, 1
    %v365 = vsel %vm147, %v364, %v363
    %v366 = vsel %vm149, %v365, 0
    %368 = vmatprep.subr.mxu0 0.0
    %369 = vmatpush1.msra.mxu0 0.0
    %370 = vmatprep.subr.mxu0 0.0
    %371 = vmatpush1.msra.mxu0 0.0
    %372 = vmatprep.subr.mxu0 0.0
    %373 = vmatpush1.msra.mxu0 0.0
    %374 = vmatprep.subr.mxu0 0.0
    %375 = vmatpush1.msra.mxu0 0.0
    %376 = vmatprep.subr.mxu0 0.0
    %377 = vmatpush1.msra.mxu0 0.0
    %378 = vmatprep.subr.mxu0 0.0
    %379 = vmatpush1.msra.mxu0 0.0
    %380 = vmatprep.subr.mxu0 0.0
    %381 = vmatpush1.msra.mxu0 0.0
    %382 = vmatprep.subr.mxu0 0.0
    %383 = vmatpush1.msra.mxu0 0.0
    %384 = vmatprep.subr.mxu0 0.0
    %385 = vmatpush1.msra.mxu0 0.0
    %386 = vmatprep.subr.mxu0 0.0
    %387 = vmatpush1.msra.mxu0 0.0
    %388 = vmatprep.subr.mxu0 0.0
    %389 = vmatpush1.msra.mxu0 0.0
    %390 = vmatprep.subr.mxu0 0.0
    %391 = vmatpush1.msra.mxu0 0.0
    %392 = vmatprep.subr.mxu0 0.0
    %393 = vmatpush1.msra.mxu0 0.0
    %394 = vmatprep.subr.mxu0 0.0
    %395 = vmatpush1.msra.mxu0 0.0
    %396 = vmatprep.subr.mxu0 0.0
    %397 = vmatpush1.msra.mxu0 0.0
    %398 = vmatprep.subr.mxu0 0.0
    %399 = vmatpush1.msra.mxu0 %v154
    %400 = vmatprep.subr.mxu0 0.0
    %401 = vmatpush2.msra.mxu0 0.0
    %402 = vmatprep.subr.mxu0 0.0
    %403 = vmatpush2.msra.mxu0 0.0
    %404 = vmatprep.subr.mxu0 0.0
    %405 = vmatpush2.msra.mxu0 0.0
    %406 = vmatprep.subr.mxu0 0.0
    %407 = vmatpush2.msra.mxu0 0.0
    %408 = vmatprep.subr.mxu0 0.0
    %409 = vmatpush2.msra.mxu0 0.0
    %410 = vmatprep.subr.mxu0 0.0
    %411 = vmatpush2.msra.mxu0 0.0
    %412 = vmatprep.subr.mxu0 0.0
    %413 = vmatpush2.msra.mxu0 0.0
    %414 = vmatprep.subr.mxu0 0.0
    %415 = vmatpush2.msra.mxu0 0.0
    %416 = vmatprep.subr.mxu0 0.0
    %417 = vmatpush2.msra.mxu0 0.0
    %418 = vmatprep.subr.mxu0 0.0
    %419 = vmatpush2.msra.mxu0 0.0
    %420 = vmatprep.subr.mxu0 0.0
    %421 = vmatpush2.msra.mxu0 0.0
    %422 = vmatprep.subr.mxu0 0.0
    %423 = vmatpush2.msra.mxu0 0.0
    %424 = vmatprep.subr.mxu0 0.0
    %425 = vmatpush2.msra.mxu0 0.0
    %426 = vmatprep.subr.mxu0 0.0
    %427 = vmatpush2.msra.mxu0 0.0
    %428 = vmatprep.subr.mxu0 0.0
    %429 = vmatpush2.msra.mxu0 0.0
    %430 = vmatprep.subr.mxu0 0.0
    %431 = vmatpush2.msra.mxu0 0.0
    %432 = vmatprep.mubr.f32.mxu0 0.0
    %433 = vmatmul.mubr.f32.gmra.mxu0 %v366
    %v434 = vpop.f32.mrf.mxu0
    %v435 = vadd.f32 %v341, %v434
    %v436 = vpop.f32.mrf.mxu0
    %437 = vdwg.mxu0
    %v438 = vadd.f32 %v435, %v230
    %v439 = vxor.u32 %v438, 2147483648
    %v440 = vmul.f32 %v439, 1.442695
    %v441 = vpow.pop %v440
    %v442 = vadd.f32 %v441, 1.0
    %v443 = vrcp.pop %v442
    %v444 = vmul.f32 1.0, %v443
    %v445 = vtanh.pop %v438
    %v446 = vmul.f32 %v444, %v254
    %448 = vrot.lane.b32.xlu0 %v445, 80
    %v449 = vpop.permute.xlu0 %448
    %v451 = vmul.f32 %v444, %v449
    %453 = vrot.lane.b32.xlu0 %v451, 24
    %v454 = vpop.permute.xlu0 %453
    %v456 = vadd.f32 %v446, %v454
    %v457 = vtanh.pop %v456
    %459 = vrot.lane.b32.xlu0 %v457, 48
    %v460 = vpop.permute.xlu0 %459
    %v462 = vmul.f32 %v444, %v460
    %v463 = vld [vmem:[%s0 + $0x2] sm:$0x1]
    %v464 = vld [vmem:[%s0 + $0xa] sm:$0x1]
    %v465 = vld [vmem:[%s0 + $0x12] sm:$0x1]
    %v466 = vld [vmem:[%s0 + $0x1a] sm:$0x1]
    %v467 = vld [vmem:[%s0 + $0x22] sm:$0x1]
    %v468 = vld [vmem:[%s0 + $0x2a] sm:$0x1]
    %v469 = vld [vmem:[%s0 + $0x32] sm:$0x1]
    %v470 = vld [vmem:[%s0 + $0x3a] sm:$0x1]
    %472 = vrot.lane.b32.xlu0 %v462, 56
    %v473 = vpop.permute.xlu0 %472
    %v474 = vsel %vm46, %v473, 0
    %476 = vmatprep.subr.mxu0 0.0
    %477 = vmatpush1.msra.mxu0 0.0
    %478 = vmatprep.subr.mxu0 0.0
    %479 = vmatpush1.msra.mxu0 0.0
    %480 = vmatprep.subr.mxu0 0.0
    %481 = vmatpush1.msra.mxu0 0.0
    %482 = vmatprep.subr.mxu0 0.0
    %483 = vmatpush1.msra.mxu0 0.0
    %484 = vmatprep.subr.mxu0 0.0
    %485 = vmatpush1.msra.mxu0 0.0
    %486 = vmatprep.subr.mxu0 0.0
    %487 = vmatpush1.msra.mxu0 0.0
    %488 = vmatprep.subr.mxu0 0.0
    %489 = vmatpush1.msra.mxu0 0.0
    %490 = vmatprep.subr.mxu0 0.0
    %491 = vmatpush1.msra.mxu0 0.0
    %492 = vmatprep.subr.mxu0 0.0
    %493 = vmatpush1.msra.mxu0 0.0
    %494 = vmatprep.subr.mxu0 0.0
    %495 = vmatpush1.msra.mxu0 0.0
    %496 = vmatprep.subr.mxu0 0.0
    %497 = vmatpush1.msra.mxu0 0.0
    %498 = vmatprep.subr.mxu0 0.0
    %499 = vmatpush1.msra.mxu0 0.0
    %500 = vmatprep.subr.mxu0 0.0
    %501 = vmatpush1.msra.mxu0 0.0
    %502 = vmatprep.subr.mxu0 0.0
    %503 = vmatpush1.msra.mxu0 %v34
    %504 = vmatprep.subr.mxu0 0.0
    %505 = vmatpush1.msra.mxu0 %v33
    %506 = vmatprep.subr.mxu0 0.0
    %507 = vmatpush1.msra.mxu0 %v32
    %508 = vmatprep.subr.mxu0 0.0
    %509 = vmatpush2.msra.mxu0 0.0
    %510 = vmatprep.subr.mxu0 0.0
    %511 = vmatpush2.msra.mxu0 0.0
    %512 = vmatprep.subr.mxu0 0.0
    %513 = vmatpush2.msra.mxu0 0.0
    %514 = vmatprep.subr.mxu0 0.0
    %515 = vmatpush2.msra.mxu0 0.0
    %516 = vmatprep.subr.mxu0 0.0
    %517 = vmatpush2.msra.mxu0 0.0
    %518 = vmatprep.subr.mxu0 0.0
    %519 = vmatpush2.msra.mxu0 0.0
    %520 = vmatprep.subr.mxu0 0.0
    %521 = vmatpush2.msra.mxu0 0.0
    %522 = vmatprep.subr.mxu0 0.0
    %523 = vmatpush2.msra.mxu0 0.0
    %524 = vmatprep.subr.mxu0 0.0
    %525 = vmatpush2.msra.mxu0 0.0
    %526 = vmatprep.subr.mxu0 0.0
    %527 = vmatpush2.msra.mxu0 0.0
    %528 = vmatprep.subr.mxu0 0.0
    %529 = vmatpush2.msra.mxu0 0.0
    %530 = vmatprep.subr.mxu0 0.0
    %531 = vmatpush2.msra.mxu0 0.0
    %532 = vmatprep.subr.mxu0 0.0
    %533 = vmatpush2.msra.mxu0 0.0
    %534 = vmatprep.subr.mxu0 0.0
    %535 = vmatpush2.msra.mxu0 0.0
    %536 = vmatprep.subr.mxu0 0.0
    %537 = vmatpush2.msra.mxu0 0.0
    %538 = vmatprep.subr.mxu0 0.0
    %539 = vmatpush2.msra.mxu0 0.0
    %540 = vmatprep.mubr.f32.mxu0 0.0
    %541 = vmatmul.mubr.f32.gmra.mxu0 %v474
    %v542 = vpop.f32.mrf.mxu0
    %v543 = vadd.f32 0.0, %v542
    %v544 = vpop.f32.mrf.mxu0
    %545 = vdwg.mxu0
    %v554 = vrot.slane %v464, 7
    %v555 = vsel %vm129, %v554, %v463
    %v556 = vrot.slane %v465, 6
    %v557 = vsel %vm132, %v556, %v555
    %v558 = vrot.slane %v466, 5
    %v559 = vsel %vm135, %v558, %v557
    %v560 = vrot.slane %v467, 4
    %v561 = vsel %vm138, %v560, %v559
    %v562 = vrot.slane %v468, 3
    %v563 = vsel %vm141, %v562, %v561
    %v564 = vrot.slane %v469, 2
    %v565 = vsel %vm144, %v564, %v563
    %v566 = vrot.slane %v470, 1
    %v567 = vsel %vm147, %v566, %v565
    %v568 = vsel %vm149, %v567, 0
    %570 = vmatprep.subr.mxu0 0.0
    %571 = vmatpush1.msra.mxu0 0.0
    %572 = vmatprep.subr.mxu0 0.0
    %573 = vmatpush1.msra.mxu0 0.0
    %574 = vmatprep.subr.mxu0 0.0
    %575 = vmatpush1.msra.mxu0 0.0
    %576 = vmatprep.subr.mxu0 0.0
    %577 = vmatpush1.msra.mxu0 0.0
    %578 = vmatprep.subr.mxu0 0.0
    %579 = vmatpush1.msra.mxu0 0.0
    %580 = vmatprep.subr.mxu0 0.0
    %581 = vmatpush1.msra.mxu0 0.0
    %582 = vmatprep.subr.mxu0 0.0
    %583 = vmatpush1.msra.mxu0 0.0
    %584 = vmatprep.subr.mxu0 0.0
    %585 = vmatpush1.msra.mxu0 0.0
    %586 = vmatprep.subr.mxu0 0.0
    %587 = vmatpush1.msra.mxu0 0.0
    %588 = vmatprep.subr.mxu0 0.0
    %589 = vmatpush1.msra.mxu0 0.0
    %590 = vmatprep.subr.mxu0 0.0
    %591 = vmatpush1.msra.mxu0 0.0
    %592 = vmatprep.subr.mxu0 0.0
    %593 = vmatpush1.msra.mxu0 0.0
    %594 = vmatprep.subr.mxu0 0.0
    %595 = vmatpush1.msra.mxu0 0.0
    %596 = vmatprep.subr.mxu0 0.0
    %597 = vmatpush1.msra.mxu0 0.0
    %598 = vmatprep.subr.mxu0 0.0
    %599 = vmatpush1.msra.mxu0 0.0
    %600 = vmatprep.subr.mxu0 0.0
    %601 = vmatpush1.msra.mxu0 %v154
    %602 = vmatprep.subr.mxu0 0.0
    %603 = vmatpush2.msra.mxu0 0.0
    %604 = vmatprep.subr.mxu0 0.0
    %605 = vmatpush2.msra.mxu0 0.0
    %606 = vmatprep.subr.mxu0 0.0
    %607 = vmatpush2.msra.mxu0 0.0
    %608 = vmatprep.subr.mxu0 0.0
    %609 = vmatpush2.msra.mxu0 0.0
    %610 = vmatprep.subr.mxu0 0.0
    %611 = vmatpush2.msra.mxu0 0.0
    %612 = vmatprep.subr.mxu0 0.0
    %613 = vmatpush2.msra.mxu0 0.0
    %614 = vmatprep.subr.mxu0 0.0
    %615 = vmatpush2.msra.mxu0 0.0
    %616 = vmatprep.subr.mxu0 0.0
    %617 = vmatpush2.msra.mxu0 0.0
    %618 = vmatprep.subr.mxu0 0.0
    %619 = vmatpush2.msra.mxu0 0.0
    %620 = vmatprep.subr.mxu0 0.0
    %621 = vmatpush2.msra.mxu0 0.0
    %622 = vmatprep.subr.mxu0 0.0
    %623 = vmatpush2.msra.mxu0 0.0
    %624 = vmatprep.subr.mxu0 0.0
    %625 = vmatpush2.msra.mxu0 0.0
    %626 = vmatprep.subr.mxu0 0.0
    %627 = vmatpush2.msra.mxu0 0.0
    %628 = vmatprep.subr.mxu0 0.0
    %629 = vmatpush2.msra.mxu0 0.0
    %630 = vmatprep.subr.mxu0 0.0
    %631 = vmatpush2.msra.mxu0 0.0
    %632 = vmatprep.subr.mxu0 0.0
    %633 = vmatpush2.msra.mxu0 0.0
    %634 = vmatprep.mubr.f32.mxu0 0.0
    %635 = vmatmul.mubr.f32.gmra.mxu0 %v568
    %v636 = vpop.f32.mrf.mxu0
    %v637 = vadd.f32 %v543, %v636
    %v638 = vpop.f32.mrf.mxu0
    %639 = vdwg.mxu0
    %v640 = vadd.f32 %v637, %v230
    %v641 = vxor.u32 %v640, 2147483648
    %v642 = vmul.f32 %v641, 1.442695
    %v643 = vpow.pop %v642
    %v644 = vadd.f32 %v643, 1.0
    %v645 = vrcp.pop %v644
    %v646 = vmul.f32 1.0, %v645
    %v647 = vtanh.pop %v640
    %v648 = vmul.f32 %v646, %v456
    %650 = vrot.lane.b32.xlu0 %v647, 80
    %v651 = vpop.permute.xlu0 %650
    %v653 = vmul.f32 %v646, %v651
    %655 = vrot.lane.b32.xlu0 %v653, 24
    %v656 = vpop.permute.xlu0 %655
    %v658 = vadd.f32 %v648, %v656
    %v659 = vtanh.pop %v658
    %661 = vrot.lane.b32.xlu0 %v659, 48
    %v662 = vpop.permute.xlu0 %661
    %v664 = vmul.f32 %v646, %v662
    %v665 = vld [vmem:[%s0 + $0x3] sm:$0x1]
    %v666 = vld [vmem:[%s0 + $0xb] sm:$0x1]
    %v667 = vld [vmem:[%s0 + $0x13] sm:$0x1]
    %v668 = vld [vmem:[%s0 + $0x1b] sm:$0x1]
    %v669 = vld [vmem:[%s0 + $0x23] sm:$0x1]
    %v670 = vld [vmem:[%s0 + $0x2b] sm:$0x1]
    %v671 = vld [vmem:[%s0 + $0x33] sm:$0x1]
    %v672 = vld [vmem:[%s0 + $0x3b] sm:$0x1]
    %674 = vrot.lane.b32.xlu0 %v664, 56
    %v675 = vpop.permute.xlu0 %674
    %v676 = vsel %vm46, %v675, 0
    %678 = vmatprep.subr.mxu0 0.0
    %679 = vmatpush1.msra.mxu0 0.0
    %680 = vmatprep.subr.mxu0 0.0
    %681 = vmatpush1.msra.mxu0 0.0
    %682 = vmatprep.subr.mxu0 0.0
    %683 = vmatpush1.msra.mxu0 0.0
    %684 = vmatprep.subr.mxu0 0.0
    %685 = vmatpush1.msra.mxu0 0.0
    %686 = vmatprep.subr.mxu0 0.0
    %687 = vmatpush1.msra.mxu0 0.0
    %688 = vmatprep.subr.mxu0 0.0
    %689 = vmatpush1.msra.mxu0 0.0
    %690 = vmatprep.subr.mxu0 0.0
    %691 = vmatpush1.msra.mxu0 0.0
    %692 = vmatprep.subr.mxu0 0.0
    %693 = vmatpush1.msra.mxu0 0.0
    %694 = vmatprep.subr.mxu0 0.0
    %695 = vmatpush1.msra.mxu0 0.0
    %696 = vmatprep.subr.mxu0 0.0
    %697 = vmatpush1.msra.mxu0 0.0
    %698 = vmatprep.subr.mxu0 0.0
    %699 = vmatpush1.msra.mxu0 0.0
    %700 = vmatprep.subr.mxu0 0.0
    %701 = vmatpush1.msra.mxu0 0.0
    %702 = vmatprep.subr.mxu0 0.0
    %703 = vmatpush1.msra.mxu0 0.0
    %704 = vmatprep.subr.mxu0 0.0
    %705 = vmatpush1.msra.mxu0 %v34
    %706 = vmatprep.subr.mxu0 0.0
    %707 = vmatpush1.msra.mxu0 %v33
    %708 = vmatprep.subr.mxu0 0.0
    %709 = vmatpush1.msra.mxu0 %v32
    %710 = vmatprep.subr.mxu0 0.0
    %711 = vmatpush2.msra.mxu0 0.0
    %712 = vmatprep.subr.mxu0 0.0
    %713 = vmatpush2.msra.mxu0 0.0
    %714 = vmatprep.subr.mxu0 0.0
    %715 = vmatpush2.msra.mxu0 0.0
    %716 = vmatprep.subr.mxu0 0.0
    %717 = vmatpush2.msra.mxu0 0.0
    %718 = vmatprep.subr.mxu0 0.0
    %719 = vmatpush2.msra.mxu0 0.0
    %720 = vmatprep.subr.mxu0 0.0
    %721 = vmatpush2.msra.mxu0 0.0
    %722 = vmatprep.subr.mxu0 0.0
    %723 = vmatpush2.msra.mxu0 0.0
    %724 = vmatprep.subr.mxu0 0.0
    %725 = vmatpush2.msra.mxu0 0.0
    %726 = vmatprep.subr.mxu0 0.0
    %727 = vmatpush2.msra.mxu0 0.0
    %728 = vmatprep.subr.mxu0 0.0
    %729 = vmatpush2.msra.mxu0 0.0
    %730 = vmatprep.subr.mxu0 0.0
    %731 = vmatpush2.msra.mxu0 0.0
    %732 = vmatprep.subr.mxu0 0.0
    %733 = vmatpush2.msra.mxu0 0.0
    %734 = vmatprep.subr.mxu0 0.0
    %735 = vmatpush2.msra.mxu0 0.0
    %736 = vmatprep.subr.mxu0 0.0
    %737 = vmatpush2.msra.mxu0 0.0
    %738 = vmatprep.subr.mxu0 0.0
    %739 = vmatpush2.msra.mxu0 0.0
    %740 = vmatprep.subr.mxu0 0.0
    %741 = vmatpush2.msra.mxu0 0.0
    %742 = vmatprep.mubr.f32.mxu0 0.0
    %743 = vmatmul.mubr.f32.gmra.mxu0 %v676
    %v744 = vpop.f32.mrf.mxu0
    %v745 = vadd.f32 0.0, %v744
    %v746 = vpop.f32.mrf.mxu0
    %747 = vdwg.mxu0
    %v756 = vrot.slane %v666, 7
    %v757 = vsel %vm129, %v756, %v665
    %v758 = vrot.slane %v667, 6
    %v759 = vsel %vm132, %v758, %v757
    %v760 = vrot.slane %v668, 5
    %v761 = vsel %vm135, %v760, %v759
    %v762 = vrot.slane %v669, 4
    %v763 = vsel %vm138, %v762, %v761
    %v764 = vrot.slane %v670, 3
    %v765 = vsel %vm141, %v764, %v763
    %v766 = vrot.slane %v671, 2
    %v767 = vsel %vm144, %v766, %v765
    %v768 = vrot.slane %v672, 1
    %v769 = vsel %vm147, %v768, %v767
    %v770 = vsel %vm149, %v769, 0
    %772 = vmatprep.subr.mxu0 0.0
    %773 = vmatpush1.msra.mxu0 0.0
    %774 = vmatprep.subr.mxu0 0.0
    %775 = vmatpush1.msra.mxu0 0.0
    %776 = vmatprep.subr.mxu0 0.0
    %777 = vmatpush1.msra.mxu0 0.0
    %778 = vmatprep.subr.mxu0 0.0
    %779 = vmatpush1.msra.mxu0 0.0
    %780 = vmatprep.subr.mxu0 0.0
    %781 = vmatpush1.msra.mxu0 0.0
    %782 = vmatprep.subr.mxu0 0.0
    %783 = vmatpush1.msra.mxu0 0.0
    %784 = vmatprep.subr.mxu0 0.0
    %785 = vmatpush1.msra.mxu0 0.0
    %786 = vmatprep.subr.mxu0 0.0
    %787 = vmatpush1.msra.mxu0 0.0
    %788 = vmatprep.subr.mxu0 0.0
    %789 = vmatpush1.msra.mxu0 0.0
    %790 = vmatprep.subr.mxu0 0.0
    %791 = vmatpush1.msra.mxu0 0.0
    %792 = vmatprep.subr.mxu0 0.0
    %793 = vmatpush1.msra.mxu0 0.0
    %794 = vmatprep.subr.mxu0 0.0
    %795 = vmatpush1.msra.mxu0 0.0
    %796 = vmatprep.subr.mxu0 0.0
    %797 = vmatpush1.msra.mxu0 0.0
    %798 = vmatprep.subr.mxu0 0.0
    %799 = vmatpush1.msra.mxu0 0.0
    %800 = vmatprep.subr.mxu0 0.0
    %801 = vmatpush1.msra.mxu0 0.0
    %802 = vmatprep.subr.mxu0 0.0
    %803 = vmatpush1.msra.mxu0 %v154
    %804 = vmatprep.subr.mxu0 0.0
    %805 = vmatpush2.msra.mxu0 0.0
    %806 = vmatprep.subr.mxu0 0.0
    %807 = vmatpush2.msra.mxu0 0.0
    %808 = vmatprep.subr.mxu0 0.0
    %809 = vmatpush2.msra.mxu0 0.0
    %810 = vmatprep.subr.mxu0 0.0
    %811 = vmatpush2.msra.mxu0 0.0
    %812 = vmatprep.subr.mxu0 0.0
    %813 = vmatpush2.msra.mxu0 0.0
    %814 = vmatprep.subr.mxu0 0.0
    %815 = vmatpush2.msra.mxu0 0.0
    %816 = vmatprep.subr.mxu0 0.0
    %817 = vmatpush2.msra.mxu0 0.0
    %818 = vmatprep.subr.mxu0 0.0
    %819 = vmatpush2.msra.mxu0 0.0
    %820 = vmatprep.subr.mxu0 0.0
    %821 = vmatpush2.msra.mxu0 0.0
    %822 = vmatprep.subr.mxu0 0.0
    %823 = vmatpush2.msra.mxu0 0.0
    %824 = vmatprep.subr.mxu0 0.0
    %825 = vmatpush2.msra.mxu0 0.0
    %826 = vmatprep.subr.mxu0 0.0
    %827 = vmatpush2.msra.mxu0 0.0
    %828 = vmatprep.subr.mxu0 0.0
    %829 = vmatpush2.msra.mxu0 0.0
    %830 = vmatprep.subr.mxu0 0.0
    %831 = vmatpush2.msra.mxu0 0.0
    %832 = vmatprep.subr.mxu0 0.0
    %833 = vmatpush2.msra.mxu0 0.0
    %834 = vmatprep.subr.mxu0 0.0
    %835 = vmatpush2.msra.mxu0 0.0
    %836 = vmatprep.mubr.f32.mxu0 0.0
    %837 = vmatmul.mubr.f32.gmra.mxu0 %v770
    %v838 = vpop.f32.mrf.mxu0
    %v839 = vadd.f32 %v745, %v838
    %v840 = vpop.f32.mrf.mxu0
    %841 = vdwg.mxu0
    %v842 = vadd.f32 %v839, %v230
    %v843 = vxor.u32 %v842, 2147483648
    %v844 = vmul.f32 %v843, 1.442695
    %v845 = vpow.pop %v844
    %v846 = vadd.f32 %v845, 1.0
    %v847 = vrcp.pop %v846
    %v848 = vmul.f32 1.0, %v847
    %v849 = vtanh.pop %v842
    %v850 = vmul.f32 %v848, %v658
    %852 = vrot.lane.b32.xlu0 %v849, 80
    %v853 = vpop.permute.xlu0 %852
    %v855 = vmul.f32 %v848, %v853
    %857 = vrot.lane.b32.xlu0 %v855, 24
    %v858 = vpop.permute.xlu0 %857
    %v860 = vadd.f32 %v850, %v858
    %v861 = vtanh.pop %v860
    %863 = vrot.lane.b32.xlu0 %v861, 48
    %v864 = vpop.permute.xlu0 %863
    %v866 = vmul.f32 %v848, %v864
    %v867 = vld [vmem:[%s0 + $0x4] sm:$0x1]
    %v868 = vld [vmem:[%s0 + $0xc] sm:$0x1]
    %v869 = vld [vmem:[%s0 + $0x14] sm:$0x1]
    %v870 = vld [vmem:[%s0 + $0x1c] sm:$0x1]
    %v871 = vld [vmem:[%s0 + $0x24] sm:$0x1]
    %v872 = vld [vmem:[%s0 + $0x2c] sm:$0x1]
    %v873 = vld [vmem:[%s0 + $0x34] sm:$0x1]
    %v874 = vld [vmem:[%s0 + $0x3c] sm:$0x1]
    %876 = vrot.lane.b32.xlu0 %v866, 56
    %v877 = vpop.permute.xlu0 %876
    %v878 = vsel %vm46, %v877, 0
    %880 = vmatprep.subr.mxu0 0.0
    %881 = vmatpush1.msra.mxu0 0.0
    %882 = vmatprep.subr.mxu0 0.0
    %883 = vmatpush1.msra.mxu0 0.0
    %884 = vmatprep.subr.mxu0 0.0
    %885 = vmatpush1.msra.mxu0 0.0
    %886 = vmatprep.subr.mxu0 0.0
    %887 = vmatpush1.msra.mxu0 0.0
    %888 = vmatprep.subr.mxu0 0.0
    %889 = vmatpush1.msra.mxu0 0.0
    %890 = vmatprep.subr.mxu0 0.0
    %891 = vmatpush1.msra.mxu0 0.0
    %892 = vmatprep.subr.mxu0 0.0
    %893 = vmatpush1.msra.mxu0 0.0
    %894 = vmatprep.subr.mxu0 0.0
    %895 = vmatpush1.msra.mxu0 0.0
    %896 = vmatprep.subr.mxu0 0.0
    %897 = vmatpush1.msra.mxu0 0.0
    %898 = vmatprep.subr.mxu0 0.0
    %899 = vmatpush1.msra.mxu0 0.0
    %900 = vmatprep.subr.mxu0 0.0
    %901 = vmatpush1.msra.mxu0 0.0
    %902 = vmatprep.subr.mxu0 0.0
    %903 = vmatpush1.msra.mxu0 0.0
    %904 = vmatprep.subr.mxu0 0.0
    %905 = vmatpush1.msra.mxu0 0.0
    %906 = vmatprep.subr.mxu0 0.0
    %907 = vmatpush1.msra.mxu0 %v34
    %908 = vmatprep.subr.mxu0 0.0
    %909 = vmatpush1.msra.mxu0 %v33
    %910 = vmatprep.subr.mxu0 0.0
    %911 = vmatpush1.msra.mxu0 %v32
    %912 = vmatprep.subr.mxu0 0.0
    %913 = vmatpush2.msra.mxu0 0.0
    %914 = vmatprep.subr.mxu0 0.0
    %915 = vmatpush2.msra.mxu0 0.0
    %916 = vmatprep.subr.mxu0 0.0
    %917 = vmatpush2.msra.mxu0 0.0
    %918 = vmatprep.subr.mxu0 0.0
    %919 = vmatpush2.msra.mxu0 0.0
    %920 = vmatprep.subr.mxu0 0.0
    %921 = vmatpush2.msra.mxu0 0.0
    %922 = vmatprep.subr.mxu0 0.0
    %923 = vmatpush2.msra.mxu0 0.0
    %924 = vmatprep.subr.mxu0 0.0
    %925 = vmatpush2.msra.mxu0 0.0
    %926 = vmatprep.subr.mxu0 0.0
    %927 = vmatpush2.msra.mxu0 0.0
    %928 = vmatprep.subr.mxu0 0.0
    %929 = vmatpush2.msra.mxu0 0.0
    %930 = vmatprep.subr.mxu0 0.0
    %931 = vmatpush2.msra.mxu0 0.0
    %932 = vmatprep.subr.mxu0 0.0
    %933 = vmatpush2.msra.mxu0 0.0
    %934 = vmatprep.subr.mxu0 0.0
    %935 = vmatpush2.msra.mxu0 0.0
    %936 = vmatprep.subr.mxu0 0.0
    %937 = vmatpush2.msra.mxu0 0.0
    %938 = vmatprep.subr.mxu0 0.0
    %939 = vmatpush2.msra.mxu0 0.0
    %940 = vmatprep.subr.mxu0 0.0
    %941 = vmatpush2.msra.mxu0 0.0
    %942 = vmatprep.subr.mxu0 0.0
    %943 = vmatpush2.msra.mxu0 0.0
    %944 = vmatprep.mubr.f32.mxu0 0.0
    %945 = vmatmul.mubr.f32.gmra.mxu0 %v878
    %v946 = vpop.f32.mrf.mxu0
    %v947 = vadd.f32 0.0, %v946
    %v948 = vpop.f32.mrf.mxu0
    %949 = vdwg.mxu0
    %v958 = vrot.slane %v868, 7
    %v959 = vsel %vm129, %v958, %v867
    %v960 = vrot.slane %v869, 6
    %v961 = vsel %vm132, %v960, %v959
    %v962 = vrot.slane %v870, 5
    %v963 = vsel %vm135, %v962, %v961
    %v964 = vrot.slane %v871, 4
    %v965 = vsel %vm138, %v964, %v963
    %v966 = vrot.slane %v872, 3
    %v967 = vsel %vm141, %v966, %v965
    %v968 = vrot.slane %v873, 2
    %v969 = vsel %vm144, %v968, %v967
    %v970 = vrot.slane %v874, 1
    %v971 = vsel %vm147, %v970, %v969
    %v972 = vsel %vm149, %v971, 0
    %974 = vmatprep.subr.mxu0 0.0
    %975 = vmatpush1.msra.mxu0 0.0
    %976 = vmatprep.subr.mxu0 0.0
    %977 = vmatpush1.msra.mxu0 0.0
    %978 = vmatprep.subr.mxu0 0.0
    %979 = vmatpush1.msra.mxu0 0.0
    %980 = vmatprep.subr.mxu0 0.0
    %981 = vmatpush1.msra.mxu0 0.0
    %982 = vmatprep.subr.mxu0 0.0
    %983 = vmatpush1.msra.mxu0 0.0
    %984 = vmatprep.subr.mxu0 0.0
    %985 = vmatpush1.msra.mxu0 0.0
    %986 = vmatprep.subr.mxu0 0.0
    %987 = vmatpush1.msra.mxu0 0.0
    %988 = vmatprep.subr.mxu0 0.0
    %989 = vmatpush1.msra.mxu0 0.0
    %990 = vmatprep.subr.mxu0 0.0
    %991 = vmatpush1.msra.mxu0 0.0
    %992 = vmatprep.subr.mxu0 0.0
    %993 = vmatpush1.msra.mxu0 0.0
    %994 = vmatprep.subr.mxu0 0.0
    %995 = vmatpush1.msra.mxu0 0.0
    %996 = vmatprep.subr.mxu0 0.0
    %997 = vmatpush1.msra.mxu0 0.0
    %998 = vmatprep.subr.mxu0 0.0
    %999 = vmatpush1.msra.mxu0 0.0
    %1000 = vmatprep.subr.mxu0 0.0
    %1001 = vmatpush1.msra.mxu0 0.0
    %1002 = vmatprep.subr.mxu0 0.0
    %1003 = vmatpush1.msra.mxu0 0.0
    %1004 = vmatprep.subr.mxu0 0.0
    %1005 = vmatpush1.msra.mxu0 %v154
    %1006 = vmatprep.subr.mxu0 0.0
    %1007 = vmatpush2.msra.mxu0 0.0
    %1008 = vmatprep.subr.mxu0 0.0
    %1009 = vmatpush2.msra.mxu0 0.0
    %1010 = vmatprep.subr.mxu0 0.0
    %1011 = vmatpush2.msra.mxu0 0.0
    %1012 = vmatprep.subr.mxu0 0.0
    %1013 = vmatpush2.msra.mxu0 0.0
    %1014 = vmatprep.subr.mxu0 0.0
    %1015 = vmatpush2.msra.mxu0 0.0
    %1016 = vmatprep.subr.mxu0 0.0
    %1017 = vmatpush2.msra.mxu0 0.0
    %1018 = vmatprep.subr.mxu0 0.0
    %1019 = vmatpush2.msra.mxu0 0.0
    %1020 = vmatprep.subr.mxu0 0.0
    %1021 = vmatpush2.msra.mxu0 0.0
    %1022 = vmatprep.subr.mxu0 0.0
    %1023 = vmatpush2.msra.mxu0 0.0
    %1024 = vmatprep.subr.mxu0 0.0
    %1025 = vmatpush2.msra.mxu0 0.0
    %1026 = vmatprep.subr.mxu0 0.0
    %1027 = vmatpush2.msra.mxu0 0.0
    %1028 = vmatprep.subr.mxu0 0.0
    %1029 = vmatpush2.msra.mxu0 0.0
    %1030 = vmatprep.subr.mxu0 0.0
    %1031 = vmatpush2.msra.mxu0 0.0
    %1032 = vmatprep.subr.mxu0 0.0
    %1033 = vmatpush2.msra.mxu0 0.0
    %1034 = vmatprep.subr.mxu0 0.0
    %1035 = vmatpush2.msra.mxu0 0.0
    %1036 = vmatprep.subr.mxu0 0.0
    %1037 = vmatpush2.msra.mxu0 0.0
    %1038 = vmatprep.mubr.f32.mxu0 0.0
    %1039 = vmatmul.mubr.f32.gmra.mxu0 %v972
    %v1040 = vpop.f32.mrf.mxu0
    %v1041 = vadd.f32 %v947, %v1040
    %v1042 = vpop.f32.mrf.mxu0
    %1043 = vdwg.mxu0
    %v1044 = vadd.f32 %v1041, %v230
    %v1045 = vxor.u32 %v1044, 2147483648
    %v1046 = vmul.f32 %v1045, 1.442695
    %v1047 = vpow.pop %v1046
    %v1048 = vadd.f32 %v1047, 1.0
    %v1049 = vrcp.pop %v1048
    %v1050 = vmul.f32 1.0, %v1049
    %v1051 = vtanh.pop %v1044
    %v1052 = vmul.f32 %v1050, %v860
    %1054 = vrot.lane.b32.xlu0 %v1051, 80
    %v1055 = vpop.permute.xlu0 %1054
    %v1057 = vmul.f32 %v1050, %v1055
    %1059 = vrot.lane.b32.xlu0 %v1057, 24
    %v1060 = vpop.permute.xlu0 %1059
    %v1062 = vadd.f32 %v1052, %v1060
    %v1063 = vtanh.pop %v1062
    %1065 = vrot.lane.b32.xlu0 %v1063, 48
    %v1066 = vpop.permute.xlu0 %1065
    %v1068 = vmul.f32 %v1050, %v1066
    %v1069 = vld [vmem:[%s0 + $0x5] sm:$0x1]
    %v1070 = vld [vmem:[%s0 + $0xd] sm:$0x1]
    %v1071 = vld [vmem:[%s0 + $0x15] sm:$0x1]
    %v1072 = vld [vmem:[%s0 + $0x1d] sm:$0x1]
    %v1073 = vld [vmem:[%s0 + $0x25] sm:$0x1]
    %v1074 = vld [vmem:[%s0 + $0x2d] sm:$0x1]
    %v1075 = vld [vmem:[%s0 + $0x35] sm:$0x1]
    %v1076 = vld [vmem:[%s0 + $0x3d] sm:$0x1]
    %1078 = vrot.lane.b32.xlu0 %v1068, 56
    %v1079 = vpop.permute.xlu0 %1078
    %v1080 = vsel %vm46, %v1079, 0
    %1082 = vmatprep.subr.mxu0 0.0
    %1083 = vmatpush1.msra.mxu0 0.0
    %1084 = vmatprep.subr.mxu0 0.0
    %1085 = vmatpush1.msra.mxu0 0.0
    %1086 = vmatprep.subr.mxu0 0.0
    %1087 = vmatpush1.msra.mxu0 0.0
    %1088 = vmatprep.subr.mxu0 0.0
    %1089 = vmatpush1.msra.mxu0 0.0
    %1090 = vmatprep.subr.mxu0 0.0
    %1091 = vmatpush1.msra.mxu0 0.0
    %1092 = vmatprep.subr.mxu0 0.0
    %1093 = vmatpush1.msra.mxu0 0.0
    %1094 = vmatprep.subr.mxu0 0.0
    %1095 = vmatpush1.msra.mxu0 0.0
    %1096 = vmatprep.subr.mxu0 0.0
    %1097 = vmatpush1.msra.mxu0 0.0
    %1098 = vmatprep.subr.mxu0 0.0
    %1099 = vmatpush1.msra.mxu0 0.0
    %1100 = vmatprep.subr.mxu0 0.0
    %1101 = vmatpush1.msra.mxu0 0.0
    %1102 = vmatprep.subr.mxu0 0.0
    %1103 = vmatpush1.msra.mxu0 0.0
    %1104 = vmatprep.subr.mxu0 0.0
    %1105 = vmatpush1.msra.mxu0 0.0
    %1106 = vmatprep.subr.mxu0 0.0
    %1107 = vmatpush1.msra.mxu0 0.0
    %1108 = vmatprep.subr.mxu0 0.0
    %1109 = vmatpush1.msra.mxu0 %v34
    %1110 = vmatprep.subr.mxu0 0.0
    %1111 = vmatpush1.msra.mxu0 %v33
    %1112 = vmatprep.subr.mxu0 0.0
    %1113 = vmatpush1.msra.mxu0 %v32
    %1114 = vmatprep.subr.mxu0 0.0
    %1115 = vmatpush2.msra.mxu0 0.0
    %1116 = vmatprep.subr.mxu0 0.0
    %1117 = vmatpush2.msra.mxu0 0.0
    %1118 = vmatprep.subr.mxu0 0.0
    %1119 = vmatpush2.msra.mxu0 0.0
    %1120 = vmatprep.subr.mxu0 0.0
    %1121 = vmatpush2.msra.mxu0 0.0
    %1122 = vmatprep.subr.mxu0 0.0
    %1123 = vmatpush2.msra.mxu0 0.0
    %1124 = vmatprep.subr.mxu0 0.0
    %1125 = vmatpush2.msra.mxu0 0.0
    %1126 = vmatprep.subr.mxu0 0.0
    %1127 = vmatpush2.msra.mxu0 0.0
    %1128 = vmatprep.subr.mxu0 0.0
    %1129 = vmatpush2.msra.mxu0 0.0
    %1130 = vmatprep.subr.mxu0 0.0
    %1131 = vmatpush2.msra.mxu0 0.0
    %1132 = vmatprep.subr.mxu0 0.0
    %1133 = vmatpush2.msra.mxu0 0.0
    %1134 = vmatprep.subr.mxu0 0.0
    %1135 = vmatpush2.msra.mxu0 0.0
    %1136 = vmatprep.subr.mxu0 0.0
    %1137 = vmatpush2.msra.mxu0 0.0
    %1138 = vmatprep.subr.mxu0 0.0
    %1139 = vmatpush2.msra.mxu0 0.0
    %1140 = vmatprep.subr.mxu0 0.0
    %1141 = vmatpush2.msra.mxu0 0.0
    %1142 = vmatprep.subr.mxu0 0.0
    %1143 = vmatpush2.msra.mxu0 0.0
    %1144 = vmatprep.subr.mxu0 0.0
    %1145 = vmatpush2.msra.mxu0 0.0
    %1146 = vmatprep.mubr.f32.mxu0 0.0
    %1147 = vmatmul.mubr.f32.gmra.mxu0 %v1080
    %v1148 = vpop.f32.mrf.mxu0
    %v1149 = vadd.f32 0.0, %v1148
    %v1150 = vpop.f32.mrf.mxu0
    %1151 = vdwg.mxu0
    %v1160 = vrot.slane %v1070, 7
    %v1161 = vsel %vm129, %v1160, %v1069
    %v1162 = vrot.slane %v1071, 6
    %v1163 = vsel %vm132, %v1162, %v1161
    %v1164 = vrot.slane %v1072, 5
    %v1165 = vsel %vm135, %v1164, %v1163
    %v1166 = vrot.slane %v1073, 4
    %v1167 = vsel %vm138, %v1166, %v1165
    %v1168 = vrot.slane %v1074, 3
    %v1169 = vsel %vm141, %v1168, %v1167
    %v1170 = vrot.slane %v1075, 2
    %v1171 = vsel %vm144, %v1170, %v1169
    %v1172 = vrot.slane %v1076, 1
    %v1173 = vsel %vm147, %v1172, %v1171
    %v1174 = vsel %vm149, %v1173, 0
    %1176 = vmatprep.subr.mxu0 0.0
    %1177 = vmatpush1.msra.mxu0 0.0
    %1178 = vmatprep.subr.mxu0 0.0
    %1179 = vmatpush1.msra.mxu0 0.0
    %1180 = vmatprep.subr.mxu0 0.0
    %1181 = vmatpush1.msra.mxu0 0.0
    %1182 = vmatprep.subr.mxu0 0.0
    %1183 = vmatpush1.msra.mxu0 0.0
    %1184 = vmatprep.subr.mxu0 0.0
    %1185 = vmatpush1.msra.mxu0 0.0
    %1186 = vmatprep.subr.mxu0 0.0
    %1187 = vmatpush1.msra.mxu0 0.0
    %1188 = vmatprep.subr.mxu0 0.0
    %1189 = vmatpush1.msra.mxu0 0.0
    %1190 = vmatprep.subr.mxu0 0.0
    %1191 = vmatpush1.msra.mxu0 0.0
    %1192 = vmatprep.subr.mxu0 0.0
    %1193 = vmatpush1.msra.mxu0 0.0
    %1194 = vmatprep.subr.mxu0 0.0
    %1195 = vmatpush1.msra.mxu0 0.0
    %1196 = vmatprep.subr.mxu0 0.0
    %1197 = vmatpush1.msra.mxu0 0.0
    %1198 = vmatprep.subr.mxu0 0.0
    %1199 = vmatpush1.msra.mxu0 0.0
    %1200 = vmatprep.subr.mxu0 0.0
    %1201 = vmatpush1.msra.mxu0 0.0
    %1202 = vmatprep.subr.mxu0 0.0
    %1203 = vmatpush1.msra.mxu0 0.0
    %1204 = vmatprep.subr.mxu0 0.0
    %1205 = vmatpush1.msra.mxu0 0.0
    %1206 = vmatprep.subr.mxu0 0.0
    %1207 = vmatpush1.msra.mxu0 %v154
    %1208 = vmatprep.subr.mxu0 0.0
    %1209 = vmatpush2.msra.mxu0 0.0
    %1210 = vmatprep.subr.mxu0 0.0
    %1211 = vmatpush2.msra.mxu0 0.0
    %1212 = vmatprep.subr.mxu0 0.0
    %1213 = vmatpush2.msra.mxu0 0.0
    %1214 = vmatprep.subr.mxu0 0.0
    %1215 = vmatpush2.msra.mxu0 0.0
    %1216 = vmatprep.subr.mxu0 0.0
    %1217 = vmatpush2.msra.mxu0 0.0
    %1218 = vmatprep.subr.mxu0 0.0
    %1219 = vmatpush2.msra.mxu0 0.0
    %1220 = vmatprep.subr.mxu0 0.0
    %1221 = vmatpush2.msra.mxu0 0.0
    %1222 = vmatprep.subr.mxu0 0.0
    %1223 = vmatpush2.msra.mxu0 0.0
    %1224 = vmatprep.subr.mxu0 0.0
    %1225 = vmatpush2.msra.mxu0 0.0
    %1226 = vmatprep.subr.mxu0 0.0
    %1227 = vmatpush2.msra.mxu0 0.0
    %1228 = vmatprep.subr.mxu0 0.0
    %1229 = vmatpush2.msra.mxu0 0.0
    %1230 = vmatprep.subr.mxu0 0.0
    %1231 = vmatpush2.msra.mxu0 0.0
    %1232 = vmatprep.subr.mxu0 0.0
    %1233 = vmatpush2.msra.mxu0 0.0
    %1234 = vmatprep.subr.mxu0 0.0
    %1235 = vmatpush2.msra.mxu0 0.0
    %1236 = vmatprep.subr.mxu0 0.0
    %1237 = vmatpush2.msra.mxu0 0.0
    %1238 = vmatprep.subr.mxu0 0.0
    %1239 = vmatpush2.msra.mxu0 0.0
    %1240 = vmatprep.mubr.f32.mxu0 0.0
    %1241 = vmatmul.mubr.f32.gmra.mxu0 %v1174
    %v1242 = vpop.f32.mrf.mxu0
    %v1243 = vadd.f32 %v1149, %v1242
    %v1244 = vpop.f32.mrf.mxu0
    %1245 = vdwg.mxu0
    %v1246 = vadd.f32 %v1243, %v230
    %v1247 = vxor.u32 %v1246, 2147483648
    %v1248 = vmul.f32 %v1247, 1.442695
    %v1249 = vpow.pop %v1248
    %v1250 = vadd.f32 %v1249, 1.0
    %v1251 = vrcp.pop %v1250
    %v1252 = vmul.f32 1.0, %v1251
    %v1253 = vtanh.pop %v1246
    %v1254 = vmul.f32 %v1252, %v1062
    %1256 = vrot.lane.b32.xlu0 %v1253, 80
    %v1257 = vpop.permute.xlu0 %1256
    %v1259 = vmul.f32 %v1252, %v1257
    %1261 = vrot.lane.b32.xlu0 %v1259, 24
    %v1262 = vpop.permute.xlu0 %1261
    %v1264 = vadd.f32 %v1254, %v1262
    %v1265 = vtanh.pop %v1264
    %1267 = vrot.lane.b32.xlu0 %v1265, 48
    %v1268 = vpop.permute.xlu0 %1267
    %v1270 = vmul.f32 %v1252, %v1268
    %v1271 = vld [vmem:[%s0 + $0x6] sm:$0x1]
    %v1272 = vld [vmem:[%s0 + $0xe] sm:$0x1]
    %v1273 = vld [vmem:[%s0 + $0x16] sm:$0x1]
    %v1274 = vld [vmem:[%s0 + $0x1e] sm:$0x1]
    %v1275 = vld [vmem:[%s0 + $0x26] sm:$0x1]
    %v1276 = vld [vmem:[%s0 + $0x2e] sm:$0x1]
    %v1277 = vld [vmem:[%s0 + $0x36] sm:$0x1]
    %v1278 = vld [vmem:[%s0 + $0x3e] sm:$0x1]
    %1280 = vrot.lane.b32.xlu0 %v1270, 56
    %v1281 = vpop.permute.xlu0 %1280
    %v1282 = vsel %vm46, %v1281, 0
    %1284 = vmatprep.subr.mxu0 0.0
    %1285 = vmatpush1.msra.mxu0 0.0
    %1286 = vmatprep.subr.mxu0 0.0
    %1287 = vmatpush1.msra.mxu0 0.0
    %1288 = vmatprep.subr.mxu0 0.0
    %1289 = vmatpush1.msra.mxu0 0.0
    %1290 = vmatprep.subr.mxu0 0.0
    %1291 = vmatpush1.msra.mxu0 0.0
    %1292 = vmatprep.subr.mxu0 0.0
    %1293 = vmatpush1.msra.mxu0 0.0
    %1294 = vmatprep.subr.mxu0 0.0
    %1295 = vmatpush1.msra.mxu0 0.0
    %1296 = vmatprep.subr.mxu0 0.0
    %1297 = vmatpush1.msra.mxu0 0.0
    %1298 = vmatprep.subr.mxu0 0.0
    %1299 = vmatpush1.msra.mxu0 0.0
    %1300 = vmatprep.subr.mxu0 0.0
    %1301 = vmatpush1.msra.mxu0 0.0
    %1302 = vmatprep.subr.mxu0 0.0
    %1303 = vmatpush1.msra.mxu0 0.0
    %1304 = vmatprep.subr.mxu0 0.0
    %1305 = vmatpush1.msra.mxu0 0.0
    %1306 = vmatprep.subr.mxu0 0.0
    %1307 = vmatpush1.msra.mxu0 0.0
    %1308 = vmatprep.subr.mxu0 0.0
    %1309 = vmatpush1.msra.mxu0 0.0
    %1310 = vmatprep.subr.mxu0 0.0
    %1311 = vmatpush1.msra.mxu0 %v34
    %1312 = vmatprep.subr.mxu0 0.0
    %1313 = vmatpush1.msra.mxu0 %v33
    %1314 = vmatprep.subr.mxu0 0.0
    %1315 = vmatpush1.msra.mxu0 %v32
    %1316 = vmatprep.subr.mxu0 0.0
    %1317 = vmatpush2.msra.mxu0 0.0
    %1318 = vmatprep.subr.mxu0 0.0
    %1319 = vmatpush2.msra.mxu0 0.0
    %1320 = vmatprep.subr.mxu0 0.0
    %1321 = vmatpush2.msra.mxu0 0.0
    %1322 = vmatprep.subr.mxu0 0.0
    %1323 = vmatpush2.msra.mxu0 0.0
    %1324 = vmatprep.subr.mxu0 0.0
    %1325 = vmatpush2.msra.mxu0 0.0
    %1326 = vmatprep.subr.mxu0 0.0
    %1327 = vmatpush2.msra.mxu0 0.0
    %1328 = vmatprep.subr.mxu0 0.0
    %1329 = vmatpush2.msra.mxu0 0.0
    %1330 = vmatprep.subr.mxu0 0.0
    %1331 = vmatpush2.msra.mxu0 0.0
    %1332 = vmatprep.subr.mxu0 0.0
    %1333 = vmatpush2.msra.mxu0 0.0
    %1334 = vmatprep.subr.mxu0 0.0
    %1335 = vmatpush2.msra.mxu0 0.0
    %1336 = vmatprep.subr.mxu0 0.0
    %1337 = vmatpush2.msra.mxu0 0.0
    %1338 = vmatprep.subr.mxu0 0.0
    %1339 = vmatpush2.msra.mxu0 0.0
    %1340 = vmatprep.subr.mxu0 0.0
    %1341 = vmatpush2.msra.mxu0 0.0
    %1342 = vmatprep.subr.mxu0 0.0
    %1343 = vmatpush2.msra.mxu0 0.0
    %1344 = vmatprep.subr.mxu0 0.0
    %1345 = vmatpush2.msra.mxu0 0.0
    %1346 = vmatprep.subr.mxu0 0.0
    %1347 = vmatpush2.msra.mxu0 0.0
    %1348 = vmatprep.mubr.f32.mxu0 0.0
    %1349 = vmatmul.mubr.f32.gmra.mxu0 %v1282
    %v1350 = vpop.f32.mrf.mxu0
    %v1351 = vadd.f32 0.0, %v1350
    %v1352 = vpop.f32.mrf.mxu0
    %1353 = vdwg.mxu0
    %v1362 = vrot.slane %v1272, 7
    %v1363 = vsel %vm129, %v1362, %v1271
    %v1364 = vrot.slane %v1273, 6
    %v1365 = vsel %vm132, %v1364, %v1363
    %v1366 = vrot.slane %v1274, 5
    %v1367 = vsel %vm135, %v1366, %v1365
    %v1368 = vrot.slane %v1275, 4
    %v1369 = vsel %vm138, %v1368, %v1367
    %v1370 = vrot.slane %v1276, 3
    %v1371 = vsel %vm141, %v1370, %v1369
    %v1372 = vrot.slane %v1277, 2
    %v1373 = vsel %vm144, %v1372, %v1371
    %v1374 = vrot.slane %v1278, 1
    %v1375 = vsel %vm147, %v1374, %v1373
    %v1376 = vsel %vm149, %v1375, 0
    %1378 = vmatprep.subr.mxu0 0.0
    %1379 = vmatpush1.msra.mxu0 0.0
    %1380 = vmatprep.subr.mxu0 0.0
    %1381 = vmatpush1.msra.mxu0 0.0
    %1382 = vmatprep.subr.mxu0 0.0
    %1383 = vmatpush1.msra.mxu0 0.0
    %1384 = vmatprep.subr.mxu0 0.0
    %1385 = vmatpush1.msra.mxu0 0.0
    %1386 = vmatprep.subr.mxu0 0.0
    %1387 = vmatpush1.msra.mxu0 0.0
    %1388 = vmatprep.subr.mxu0 0.0
    %1389 = vmatpush1.msra.mxu0 0.0
    %1390 = vmatprep.subr.mxu0 0.0
    %1391 = vmatpush1.msra.mxu0 0.0
    %1392 = vmatprep.subr.mxu0 0.0
    %1393 = vmatpush1.msra.mxu0 0.0
    %1394 = vmatprep.subr.mxu0 0.0
    %1395 = vmatpush1.msra.mxu0 0.0
    %1396 = vmatprep.subr.mxu0 0.0
    %1397 = vmatpush1.msra.mxu0 0.0
    %1398 = vmatprep.subr.mxu0 0.0
    %1399 = vmatpush1.msra.mxu0 0.0
    %1400 = vmatprep.subr.mxu0 0.0
    %1401 = vmatpush1.msra.mxu0 0.0
    %1402 = vmatprep.subr.mxu0 0.0
    %1403 = vmatpush1.msra.mxu0 0.0
    %1404 = vmatprep.subr.mxu0 0.0
    %1405 = vmatpush1.msra.mxu0 0.0
    %1406 = vmatprep.subr.mxu0 0.0
    %1407 = vmatpush1.msra.mxu0 0.0
    %1408 = vmatprep.subr.mxu0 0.0
    %1409 = vmatpush1.msra.mxu0 %v154
    %1410 = vmatprep.subr.mxu0 0.0
    %1411 = vmatpush2.msra.mxu0 0.0
    %1412 = vmatprep.subr.mxu0 0.0
    %1413 = vmatpush2.msra.mxu0 0.0
    %1414 = vmatprep.subr.mxu0 0.0
    %1415 = vmatpush2.msra.mxu0 0.0
    %1416 = vmatprep.subr.mxu0 0.0
    %1417 = vmatpush2.msra.mxu0 0.0
    %1418 = vmatprep.subr.mxu0 0.0
    %1419 = vmatpush2.msra.mxu0 0.0
    %1420 = vmatprep.subr.mxu0 0.0
    %1421 = vmatpush2.msra.mxu0 0.0
    %1422 = vmatprep.subr.mxu0 0.0
    %1423 = vmatpush2.msra.mxu0 0.0
    %1424 = vmatprep.subr.mxu0 0.0
    %1425 = vmatpush2.msra.mxu0 0.0
    %1426 = vmatprep.subr.mxu0 0.0
    %1427 = vmatpush2.msra.mxu0 0.0
    %1428 = vmatprep.subr.mxu0 0.0
    %1429 = vmatpush2.msra.mxu0 0.0
    %1430 = vmatprep.subr.mxu0 0.0
    %1431 = vmatpush2.msra.mxu0 0.0
    %1432 = vmatprep.subr.mxu0 0.0
    %1433 = vmatpush2.msra.mxu0 0.0
    %1434 = vmatprep.subr.mxu0 0.0
    %1435 = vmatpush2.msra.mxu0 0.0
    %1436 = vmatprep.subr.mxu0 0.0
    %1437 = vmatpush2.msra.mxu0 0.0
    %1438 = vmatprep.subr.mxu0 0.0
    %1439 = vmatpush2.msra.mxu0 0.0
    %1440 = vmatprep.subr.mxu0 0.0
    %1441 = vmatpush2.msra.mxu0 0.0
    %1442 = vmatprep.mubr.f32.mxu0 0.0
    %1443 = vmatmul.mubr.f32.gmra.mxu0 %v1376
    %v1444 = vpop.f32.mrf.mxu0
    %v1445 = vadd.f32 %v1351, %v1444
    %v1446 = vpop.f32.mrf.mxu0
    %1447 = vdwg.mxu0
    %v1448 = vadd.f32 %v1445, %v230
    %v1449 = vxor.u32 %v1448, 2147483648
    %v1450 = vmul.f32 %v1449, 1.442695
    %v1451 = vpow.pop %v1450
    %v1452 = vadd.f32 %v1451, 1.0
    %v1453 = vrcp.pop %v1452
    %v1454 = vmul.f32 1.0, %v1453
    %v1455 = vtanh.pop %v1448
    %v1456 = vmul.f32 %v1454, %v1264
    %1458 = vrot.lane.b32.xlu0 %v1455, 80
    %v1459 = vpop.permute.xlu0 %1458
    %v1461 = vmul.f32 %v1454, %v1459
    %1463 = vrot.lane.b32.xlu0 %v1461, 24
    %v1464 = vpop.permute.xlu0 %1463
    %v1466 = vadd.f32 %v1456, %v1464
    %v1467 = vtanh.pop %v1466
    %1469 = vrot.lane.b32.xlu0 %v1467, 48
    %v1470 = vpop.permute.xlu0 %1469
    %v1472 = vmul.f32 %v1454, %v1470
    %v1473 = vld [vmem:[%s0 + $0x7] sm:$0x1]
    %v1474 = vld [vmem:[%s0 + $0xf] sm:$0x1]
    %v1475 = vld [vmem:[%s0 + $0x17] sm:$0x1]
    %v1476 = vld [vmem:[%s0 + $0x1f] sm:$0x1]
    %v1477 = vld [vmem:[%s0 + $0x27] sm:$0x1]
    %v1478 = vld [vmem:[%s0 + $0x2f] sm:$0x1]
    %v1479 = vld [vmem:[%s0 + $0x37] sm:$0x1]
    %v1480 = vld [vmem:[%s0 + $0x3f] sm:$0x1]
    %1482 = vrot.lane.b32.xlu0 %v1472, 56
    %v1483 = vpop.permute.xlu0 %1482
    %v1484 = vsel %vm46, %v1483, 0
    %1486 = vmatprep.subr.mxu0 0.0
    %1487 = vmatpush1.msra.mxu0 0.0
    %1488 = vmatprep.subr.mxu0 0.0
    %1489 = vmatpush1.msra.mxu0 0.0
    %1490 = vmatprep.subr.mxu0 0.0
    %1491 = vmatpush1.msra.mxu0 0.0
    %1492 = vmatprep.subr.mxu0 0.0
    %1493 = vmatpush1.msra.mxu0 0.0
    %1494 = vmatprep.subr.mxu0 0.0
    %1495 = vmatpush1.msra.mxu0 0.0
    %1496 = vmatprep.subr.mxu0 0.0
    %1497 = vmatpush1.msra.mxu0 0.0
    %1498 = vmatprep.subr.mxu0 0.0
    %1499 = vmatpush1.msra.mxu0 0.0
    %1500 = vmatprep.subr.mxu0 0.0
    %1501 = vmatpush1.msra.mxu0 0.0
    %1502 = vmatprep.subr.mxu0 0.0
    %1503 = vmatpush1.msra.mxu0 0.0
    %1504 = vmatprep.subr.mxu0 0.0
    %1505 = vmatpush1.msra.mxu0 0.0
    %1506 = vmatprep.subr.mxu0 0.0
    %1507 = vmatpush1.msra.mxu0 0.0
    %1508 = vmatprep.subr.mxu0 0.0
    %1509 = vmatpush1.msra.mxu0 0.0
    %1510 = vmatprep.subr.mxu0 0.0
    %1511 = vmatpush1.msra.mxu0 0.0
    %1512 = vmatprep.subr.mxu0 0.0
    %1513 = vmatpush1.msra.mxu0 %v34
    %1514 = vmatprep.subr.mxu0 0.0
    %1515 = vmatpush1.msra.mxu0 %v33
    %1516 = vmatprep.subr.mxu0 0.0
    %1517 = vmatpush1.msra.mxu0 %v32
    %1518 = vmatprep.subr.mxu0 0.0
    %1519 = vmatpush2.msra.mxu0 0.0
    %1520 = vmatprep.subr.mxu0 0.0
    %1521 = vmatpush2.msra.mxu0 0.0
    %1522 = vmatprep.subr.mxu0 0.0
    %1523 = vmatpush2.msra.mxu0 0.0
    %1524 = vmatprep.subr.mxu0 0.0
    %1525 = vmatpush2.msra.mxu0 0.0
    %1526 = vmatprep.subr.mxu0 0.0
    %1527 = vmatpush2.msra.mxu0 0.0
    %1528 = vmatprep.subr.mxu0 0.0
    %1529 = vmatpush2.msra.mxu0 0.0
    %1530 = vmatprep.subr.mxu0 0.0
    %1531 = vmatpush2.msra.mxu0 0.0
    %1532 = vmatprep.subr.mxu0 0.0
    %1533 = vmatpush2.msra.mxu0 0.0
    %1534 = vmatprep.subr.mxu0 0.0
    %1535 = vmatpush2.msra.mxu0 0.0
    %1536 = vmatprep.subr.mxu0 0.0
    %1537 = vmatpush2.msra.mxu0 0.0
    %1538 = vmatprep.subr.mxu0 0.0
    %1539 = vmatpush2.msra.mxu0 0.0
    %1540 = vmatprep.subr.mxu0 0.0
    %1541 = vmatpush2.msra.mxu0 0.0
    %1542 = vmatprep.subr.mxu0 0.0
    %1543 = vmatpush2.msra.mxu0 0.0
    %1544 = vmatprep.subr.mxu0 0.0
    %1545 = vmatpush2.msra.mxu0 0.0
    %1546 = vmatprep.subr.mxu0 0.0
    %1547 = vmatpush2.msra.mxu0 0.0
    %1548 = vmatprep.subr.mxu0 0.0
    %1549 = vmatpush2.msra.mxu0 0.0
    %1550 = vmatprep.mubr.f32.mxu0 0.0
    %1551 = vmatmul.mubr.f32.gmra.mxu0 %v1484
    %v1552 = vpop.f32.mrf.mxu0
    %v1553 = vadd.f32 0.0, %v1552
    %v1554 = vpop.f32.mrf.mxu0
    %1555 = vdwg.mxu0
    %v1564 = vrot.slane %v1474, 7
    %v1565 = vsel %vm129, %v1564, %v1473
    %v1566 = vrot.slane %v1475, 6
    %v1567 = vsel %vm132, %v1566, %v1565
    %v1568 = vrot.slane %v1476, 5
    %v1569 = vsel %vm135, %v1568, %v1567
    %v1570 = vrot.slane %v1477, 4
    %v1571 = vsel %vm138, %v1570, %v1569
    %v1572 = vrot.slane %v1478, 3
    %v1573 = vsel %vm141, %v1572, %v1571
    %v1574 = vrot.slane %v1479, 2
    %v1575 = vsel %vm144, %v1574, %v1573
    %v1576 = vrot.slane %v1480, 1
    %v1577 = vsel %vm147, %v1576, %v1575
    %v1578 = vsel %vm149, %v1577, 0
    %1580 = vmatprep.subr.mxu0 0.0
    %1581 = vmatpush1.msra.mxu0 0.0
    %1582 = vmatprep.subr.mxu0 0.0
    %1583 = vmatpush1.msra.mxu0 0.0
    %1584 = vmatprep.subr.mxu0 0.0
    %1585 = vmatpush1.msra.mxu0 0.0
    %1586 = vmatprep.subr.mxu0 0.0
    %1587 = vmatpush1.msra.mxu0 0.0
    %1588 = vmatprep.subr.mxu0 0.0
    %1589 = vmatpush1.msra.mxu0 0.0
    %1590 = vmatprep.subr.mxu0 0.0
    %1591 = vmatpush1.msra.mxu0 0.0
    %1592 = vmatprep.subr.mxu0 0.0
    %1593 = vmatpush1.msra.mxu0 0.0
    %1594 = vmatprep.subr.mxu0 0.0
    %1595 = vmatpush1.msra.mxu0 0.0
    %1596 = vmatprep.subr.mxu0 0.0
    %1597 = vmatpush1.msra.mxu0 0.0
    %1598 = vmatprep.subr.mxu0 0.0
    %1599 = vmatpush1.msra.mxu0 0.0
    %1600 = vmatprep.subr.mxu0 0.0
    %1601 = vmatpush1.msra.mxu0 0.0
    %1602 = vmatprep.subr.mxu0 0.0
    %1603 = vmatpush1.msra.mxu0 0.0
    %1604 = vmatprep.subr.mxu0 0.0
    %1605 = vmatpush1.msra.mxu0 0.0
    %1606 = vmatprep.subr.mxu0 0.0
    %1607 = vmatpush1.msra.mxu0 0.0
    %1608 = vmatprep.subr.mxu0 0.0
    %1609 = vmatpush1.msra.mxu0 0.0
    %1610 = vmatprep.subr.mxu0 0.0
    %1611 = vmatpush1.msra.mxu0 %v154
    %1612 = vmatprep.subr.mxu0 0.0
    %1613 = vmatpush2.msra.mxu0 0.0
    %1614 = vmatprep.subr.mxu0 0.0
    %1615 = vmatpush2.msra.mxu0 0.0
    %1616 = vmatprep.subr.mxu0 0.0
    %1617 = vmatpush2.msra.mxu0 0.0
    %1618 = vmatprep.subr.mxu0 0.0
    %1619 = vmatpush2.msra.mxu0 0.0
    %1620 = vmatprep.subr.mxu0 0.0
    %1621 = vmatpush2.msra.mxu0 0.0
    %1622 = vmatprep.subr.mxu0 0.0
    %1623 = vmatpush2.msra.mxu0 0.0
    %1624 = vmatprep.subr.mxu0 0.0
    %1625 = vmatpush2.msra.mxu0 0.0
    %1626 = vmatprep.subr.mxu0 0.0
    %1627 = vmatpush2.msra.mxu0 0.0
    %1628 = vmatprep.subr.mxu0 0.0
    %1629 = vmatpush2.msra.mxu0 0.0
    %1630 = vmatprep.subr.mxu0 0.0
    %1631 = vmatpush2.msra.mxu0 0.0
    %1632 = vmatprep.subr.mxu0 0.0
    %1633 = vmatpush2.msra.mxu0 0.0
    %1634 = vmatprep.subr.mxu0 0.0
    %1635 = vmatpush2.msra.mxu0 0.0
    %1636 = vmatprep.subr.mxu0 0.0
    %1637 = vmatpush2.msra.mxu0 0.0
    %1638 = vmatprep.subr.mxu0 0.0
    %1639 = vmatpush2.msra.mxu0 0.0
    %1640 = vmatprep.subr.mxu0 0.0
    %1641 = vmatpush2.msra.mxu0 0.0
    %1642 = vmatprep.subr.mxu0 0.0
    %1643 = vmatpush2.msra.mxu0 0.0
    %1644 = vmatprep.mubr.f32.mxu0 0.0
    %1645 = vmatmul.mubr.f32.gmra.mxu0 %v1578
    %v1646 = vpop.f32.mrf.mxu0
    %v1647 = vadd.f32 %v1553, %v1646
    %v1648 = vpop.f32.mrf.mxu0
    %1649 = vdwg.mxu0
    %v1650 = vadd.f32 %v1647, %v230
    %v1651 = vxor.u32 %v1650, 2147483648
    %v1652 = vmul.f32 %v1651, 1.442695
    %v1653 = vpow.pop %v1652
    %v1654 = vadd.f32 %v1653, 1.0
    %v1655 = vrcp.pop %v1654
    %v1656 = vmul.f32 1.0, %v1655
    %v1657 = vtanh.pop %v1650
    %v1658 = vmul.f32 %v1656, %v1466
    %1660 = vrot.lane.b32.xlu0 %v1657, 80
    %v1661 = vpop.permute.xlu0 %1660
    %v1663 = vmul.f32 %v1656, %v1661
    %1665 = vrot.lane.b32.xlu0 %v1663, 24
    %v1666 = vpop.permute.xlu0 %1665
    %v1668 = vadd.f32 %v1658, %v1666
    %v1669 = vtanh.pop %v1668
    %1671 = vrot.lane.b32.xlu0 %v1669, 48
    %v1672 = vpop.permute.xlu0 %1671
    %v1674 = vmul.f32 %v1656, %v1672
    %1676 = vrot.lane.b32.xlu0 %v1674, 56
    %v1677 = vpop.permute.xlu0 %1676
    %1679 = vst.msk [vmem:[#allocation2] sm:$0xff] %vm46, %v1677
    %1681 = vrot.lane.b32.xlu0 %v1668, 104
    %v1682 = vpop.permute.xlu0 %1681
    %1684 = vst.msk [vmem:[#allocation3] sm:$0xff] %vm46, %v1682
    // Predicated region
    $region30: #{tpu_custom_call.1} parent=1 // pred_check
      %p1685 = pneg %p24
    $region31: #{tpu_custom_call.1} parent=1 // pred_check_branch
      %1687 = sbr.rel (%p1685) target = $region33
    $region32: #{tpu_custom_call.1} parent=1 // pred_region
      %v1688 = vtanh.pop %v1674
      %v1689 = vld [vmem:[%s4] sm:$0xff]
      %v1690 = vld [vmem:[%s4 + $0x8] sm:$0xff]
      %v1691 = vld [vmem:[%s4 + $0x10] sm:$0xff]
      %v1692 = vld [vmem:[%s5] sm:$0x1]
      %v1694 = vlaneseq
      %v1695 = vshrl.u32 %v1694, 7
      %v1696 = vsub.s32 0, %v1695
      %v1697 = vrot.slane %v1692, %v1696
      %1700 = vrot.lane.b32.xlu0 %v1688, 56
      %v1701 = vpop.permute.xlu0 %1700
      %v1702 = vsel %vm46, %v1701, 0
      %1704 = vmatprep.subr.mxu0 0.0
      %1705 = vmatpush1.msra.mxu0 0.0
      %1706 = vmatprep.subr.mxu0 0.0
      %1707 = vmatpush1.msra.mxu0 0.0
      %1708 = vmatprep.subr.mxu0 0.0
      %1709 = vmatpush1.msra.mxu0 0.0
      %1710 = vmatprep.subr.mxu0 0.0
      %1711 = vmatpush1.msra.mxu0 0.0
      %1712 = vmatprep.subr.mxu0 0.0
      %1713 = vmatpush1.msra.mxu0 0.0
      %1714 = vmatprep.subr.mxu0 0.0
      %1715 = vmatpush1.msra.mxu0 0.0
      %1716 = vmatprep.subr.mxu0 0.0
      %1717 = vmatpush1.msra.mxu0 0.0
      %1718 = vmatprep.subr.mxu0 0.0
      %1719 = vmatpush1.msra.mxu0 0.0
      %1720 = vmatprep.subr.mxu0 0.0
      %1721 = vmatpush1.msra.mxu0 0.0
      %1722 = vmatprep.subr.mxu0 0.0
      %1723 = vmatpush1.msra.mxu0 0.0
      %1724 = vmatprep.subr.mxu0 0.0
      %1725 = vmatpush1.msra.mxu0 0.0
      %1726 = vmatprep.subr.mxu0 0.0
      %1727 = vmatpush1.msra.mxu0 0.0
      %1728 = vmatprep.subr.mxu0 0.0
      %1729 = vmatpush1.msra.mxu0 0.0
      %1730 = vmatprep.subr.mxu0 0.0
      %1731 = vmatpush1.msra.mxu0 %v1691
      %1732 = vmatprep.subr.mxu0 0.0
      %1733 = vmatpush1.msra.mxu0 %v1690
      %1734 = vmatprep.subr.mxu0 0.0
      %1735 = vmatpush1.msra.mxu0 %v1689
      %1736 = vmatprep.subr.mxu0 0.0
      %1737 = vmatpush2.msra.mxu0 0.0
      %1738 = vmatprep.subr.mxu0 0.0
      %1739 = vmatpush2.msra.mxu0 0.0
      %1740 = vmatprep.subr.mxu0 0.0
      %1741 = vmatpush2.msra.mxu0 0.0
      %1742 = vmatprep.subr.mxu0 0.0
      %1743 = vmatpush2.msra.mxu0 0.0
      %1744 = vmatprep.subr.mxu0 0.0
      %1745 = vmatpush2.msra.mxu0 0.0
      %1746 = vmatprep.subr.mxu0 0.0
      %1747 = vmatpush2.msra.mxu0 0.0
      %1748 = vmatprep.subr.mxu0 0.0
      %1749 = vmatpush2.msra.mxu0 0.0
      %1750 = vmatprep.subr.mxu0 0.0
      %1751 = vmatpush2.msra.mxu0 0.0
      %1752 = vmatprep.subr.mxu0 0.0
      %1753 = vmatpush2.msra.mxu0 0.0
      %1754 = vmatprep.subr.mxu0 0.0
      %1755 = vmatpush2.msra.mxu0 0.0
      %1756 = vmatprep.subr.mxu0 0.0
      %1757 = vmatpush2.msra.mxu0 0.0
      %1758 = vmatprep.subr.mxu0 0.0
      %1759 = vmatpush2.msra.mxu0 0.0
      %1760 = vmatprep.subr.mxu0 0.0
      %1761 = vmatpush2.msra.mxu0 0.0
      %1762 = vmatprep.subr.mxu0 0.0
      %1763 = vmatpush2.msra.mxu0 0.0
      %1764 = vmatprep.subr.mxu0 0.0
      %1765 = vmatpush2.msra.mxu0 0.0
      %1766 = vmatprep.subr.mxu0 0.0
      %1767 = vmatpush2.msra.mxu0 0.0
      %1768 = vmatprep.mubr.f32.mxu0 0.0
      %1769 = vmatmul.mubr.f32.gmra.mxu0 %v1702
      %v1770 = vpop.f32.mrf.mxu0
      %v1771 = vadd.f32 %v1697, %v1770
      %v1772 = vpop.f32.mrf.mxu0
      %1773 = vdwg.mxu0
      %1774 = vst [vmem:[#allocation4] sm:$0xff] %v1771
    $region33: #{tpu_custom_call.1} parent=1 // pred_fallthru
      _
    // Predicated region
    $region34: #{tpu_custom_call.1} parent=1 // pred_check
      _
    $region35: #{tpu_custom_call.1} parent=1 // pred_check_branch
      %1776 = sbr.rel (0) target = $region37
    $region36: #{tpu_custom_call.1} parent=1 // pred_region
      %s1778 = ssub.s32 128, 128
      %1779 = vsyncadd [#allocation5], %s1778
      %s1781 = sshll.u32 [#allocation4], 4
      %s1782 = int_to_ptr.vmem [resolvable:$true] %s1781
      %1784 = dma.vmem_to_hbm [thread:$0]  %s1782, 128, %s6, [#allocation5]
    $region37: #{tpu_custom_call.1} parent=1 // pred_fallthru
      _
    // Predicated region
    $region38: #{tpu_custom_call.1} parent=1 // pred_check
      _
    $region39: #{tpu_custom_call.1} parent=1 // pred_check_branch
      %1786 = sbr.rel (0) target = $region41
    $region40: #{tpu_custom_call.1} parent=1 // pred_region
      %1787 = dma.done [#allocation5], 128
    $region41: #{tpu_custom_call.1} parent=1 // pred_fallthru
      _
    %1788 = vsyncpa [#allocation5], 1

</llo_original>
